<compile_context>
chip_gen: v7x
topology: tpu7x:2x2x1
jax: 0.10.0
libtpu: 0.0.40
codegen_flags: <defaults>
</compile_context>

<pallas_src>
import jax
import jax.numpy as jnp
from jax.experimental import pallas as pl
from jax.experimental.pallas import tpu as pltpu

VALUE_TYPE_SHAPE = 3
EQUILIBRIUM_SHAPE = 684
SMILES_SHAPE = 2048
IN_FEATURES = VALUE_TYPE_SHAPE + EQUILIBRIUM_SHAPE + SMILES_SHAPE  # 2735
H1 = 128          # 32 + 32 + 64 concatenated branch width
H2 = 64
TB_DEFAULT = 512  # batch tile: ~15 MB VMEM double-buffered, safe on all gens


def _round_up(n, m):
    return ((n + m - 1) // m) * m


def _mymodel_kernel(x_ref, w_ref, b_ref, wc_ref, bc_ref, wo_ref, bo_ref,
                    out_ref):
    # Fused branch matmul: [tb, 2735] @ [2735, 128] -> [x1 | x2 | x3].
    h = jnp.dot(x_ref[...], w_ref[...], preferred_element_type=jnp.float32)
    h = jnp.maximum(h + b_ref[...], 0.0)                    # [tb, 128]
    # concat_dense (concat is implicit in the column layout above).
    h = jnp.dot(h, wc_ref[...], preferred_element_type=jnp.float32)
    h = jnp.maximum(h + bc_ref[...], 0.0)                    # [tb, 64]
    # output_dense (N=1): VPU mul + lane reduction instead of an MXU push.
    out = jnp.sum(h * wo_ref[...], axis=-1, keepdims=True) + bo_ref[...]
    out_ref[...] = out.astype(out_ref.dtype)


def _pick_tile(batch, tb):
    """Batch tile: multiple of 8 (or == batch), never pads close to a full
    tile, and gives >= 2 grid steps when batch allows (dual-TC v7x)."""
    if tb is not None:
        return batch if tb >= batch else tb
    n_steps = max(2, -(-batch // TB_DEFAULT))
    cand = _round_up(-(-batch // n_steps), 8)
    if cand >= batch:
        return batch          # single full-extent block, no padded rows
    return min(TB_DEFAULT, cand)


def mymodel_forward(x, params, tb=None):
    """x: [B, 2735] float32 -> [B, 1] float32."""
    B, F = x.shape
    assert F == IN_FEATURES, (F, IN_FEATURES)
    (w1, b1, w2, b2, w3, b3, wc, bc, wo, bo) = params

    # Fuse the three branch weights into one [2735, 128] matrix (tiny, weight-
    # only plumbing; done in the wrapper so the kernel sees aligned operands).
    w_big = jnp.zeros((IN_FEATURES, H1), jnp.float32)
    w_big = w_big.at[:VALUE_TYPE_SHAPE, 0:32].set(w1)
    w_big = w_big.at[VALUE_TYPE_SHAPE:VALUE_TYPE_SHAPE + EQUILIBRIUM_SHAPE,
                     32:64].set(w2)
    w_big = w_big.at[IN_FEATURES - SMILES_SHAPE:, 64:128].set(w3)
    b123 = jnp.concatenate([b1, b2, b3]).reshape(1, H1)
    bcr = bc.reshape(1, H2)
    wor = wo.reshape(1, H2)      # [64,1] -> [1,64] row for the VPU reduction
    bor = bo.reshape(1, 1)

    tb_eff = _pick_tile(B, tb)
    grid = (pl.cdiv(B, tb_eff),)

    in_specs = [
        # Packed activations: batch-tiled, double-buffered by Pallas.
        pl.BlockSpec((tb_eff, IN_FEATURES), lambda i: (i, 0)),
        # Weights / biases: VMEM-resident across all grid steps.
        pl.BlockSpec((IN_FEATURES, H1), lambda i: (0, 0)),
        pl.BlockSpec((1, H1), lambda i: (0, 0)),
        pl.BlockSpec((H1, H2), lambda i: (0, 0)),
        pl.BlockSpec((1, H2), lambda i: (0, 0)),
        pl.BlockSpec((1, H2), lambda i: (0, 0)),
        pl.BlockSpec((1, 1), lambda i: (0, 0)),
    ]
    out_specs = pl.BlockSpec((tb_eff, 1), lambda i: (i, 0))

    flops = 2 * B * (IN_FEATURES * H1 + H1 * H2 + H2)
    bytes_accessed = 4 * (B * (IN_FEATURES + 1)
                          + IN_FEATURES * H1 + H1 * H2 + H1 + 2 * H2 + 1)
    cost = pl.CostEstimate(flops=flops, transcendentals=0,
                           bytes_accessed=bytes_accessed)

    out = pl.pallas_call(
        _mymodel_kernel,
        out_shape=jax.ShapeDtypeStruct((B, 1), jnp.float32),
        grid=grid,
        in_specs=in_specs,
        out_specs=out_specs,
        compiler_params=pltpu.CompilerParams(
            dimension_semantics=("parallel",),
            vmem_limit_bytes=32 * 1024 * 1024),
        cost_estimate=cost,
    )(x, w_big, b123, wc, bcr, wor, bor)

    return out


def init_params(key):
    """Deterministic init mimicking nn.Linear (uniform +-1/sqrt(fan_in)).
    Weights stored as [in, out] (transposed vs torch) so the kernel does x @ W."""
    def linear(key, fan_in, fan_out):
        kw, kb = jax.random.split(key)
        bound = 1.0 / jnp.sqrt(fan_in)
        w = jax.random.uniform(kw, (fan_in, fan_out), jnp.float32, -bound, bound)
        b = jax.random.uniform(kb, (fan_out,), jnp.float32, -bound, bound)
        return w, b

    k1, k2, k3, k4, k5 = jax.random.split(key, 5)
    w1, b1 = linear(k1, VALUE_TYPE_SHAPE, 32)
    w2, b2 = linear(k2, EQUILIBRIUM_SHAPE, 32)
    w3, b3 = linear(k3, SMILES_SHAPE, 64)
    wc, bc = linear(k4, 128, 64)
    wo, bo = linear(k5, 64, 1)
    return (w1, b1, w2, b2, w3, b3, wc, bc, wo, bo)


if __name__ == "__main__":
    key = jax.random.PRNGKey(0)
    kp, kx = jax.random.split(key)
    params = init_params(kp)

    B = 8
    x = jax.random.normal(kx, (B, IN_FEATURES), jnp.float32)

    out = mymodel_forward(x, params)
    jax.block_until_ready(out)
    assert out.shape == (B, 1), out.shape

    # Reference check in plain JAX (mirrors the PyTorch forward).
    (w1, b1, w2, b2, w3, b3, wc, bc, wo, bo) = params
    v = x[:, :VALUE_TYPE_SHAPE]
    e = x[:, VALUE_TYPE_SHAPE:VALUE_TYPE_SHAPE + EQUILIBRIUM_SHAPE]
    s = x[:, -SMILES_SHAPE:]
    x1 = jax.nn.relu(v @ w1 + b1)
    x2 = jax.nn.relu(e @ w2 + b2)
    x3 = jax.nn.relu(s @ w3 + b3)
    h = jax.nn.relu(jnp.concatenate([x1, x2, x3], axis=1) @ wc + bc)
    ref = h @ wo + bo
    assert jnp.allclose(out, ref, atol=2e-4, rtol=2e-4), \
        float(jnp.max(jnp.abs(out - ref)))

    print("KERNEL_OK")
</pallas_src>

<mosaic_0001>
module attributes {stable_mosaic.version = 11 : i64} {
  func.func @_mymodel_kernel(%arg0: i32, %arg1: memref<8x2735xf32, #tpu.memory_space<vmem>>, %arg2: memref<2735x128xf32, #tpu.memory_space<vmem>>, %arg3: memref<1x128xf32, #tpu.memory_space<vmem>>, %arg4: memref<128x64xf32, #tpu.memory_space<vmem>>, %arg5: memref<1x64xf32, #tpu.memory_space<vmem>>, %arg6: memref<1x64xf32, #tpu.memory_space<vmem>>, %arg7: memref<1x1xf32, #tpu.memory_space<vmem>>, %arg8: memref<8x1xf32, #tpu.memory_space<vmem>>) attributes {dimension_semantics = [#tpu.dimension_semantics<parallel>], iteration_bounds = array<i64: 1>, scalar_prefetch = 0 : i64, scratch_operands = 0 : i64, tpu.core_type = #tpu.core_type<tc>, window_params = [{transform_indices = @transform_0, window_bounds = array<i64: 8, 2735>}, {pipeline_mode = #tpu.pipeline_mode<synchronous>, transform_indices = @transform_1, window_bounds = array<i64: 2735, 128>}, {pipeline_mode = #tpu.pipeline_mode<synchronous>, transform_indices = @transform_2, window_bounds = array<i64: 1, 128>}, {pipeline_mode = #tpu.pipeline_mode<synchronous>, transform_indices = @transform_3, window_bounds = array<i64: 128, 64>}, {pipeline_mode = #tpu.pipeline_mode<synchronous>, transform_indices = @transform_4, window_bounds = array<i64: 1, 64>}, {pipeline_mode = #tpu.pipeline_mode<synchronous>, transform_indices = @transform_5, window_bounds = array<i64: 1, 64>}, {pipeline_mode = #tpu.pipeline_mode<synchronous>, transform_indices = @transform_6, window_bounds = array<i64: 1, 1>}, {transform_indices = @transform_7, window_bounds = array<i64: 8, 1>}]} {
    %c0 = arith.constant 0 : index
    %c0_0 = arith.constant 0 : index
    %0 = vector.load %arg1[%c0, %c0_0] : memref<8x2735xf32, #tpu.memory_space<vmem>>, vector<8x2735xf32>
    %c0_1 = arith.constant 0 : index
    %c0_2 = arith.constant 0 : index
    %1 = vector.load %arg2[%c0_1, %c0_2] : memref<2735x128xf32, #tpu.memory_space<vmem>>, vector<2735x128xf32>
    %cst = arith.constant dense<0.000000e+00> : vector<8x128xf32>
    %2 = tpu.matmul %0, %1, %cst {dimension_numbers = #tpu.dot_dimension_numbers<[1], [0], [0], [1], [0, 0, 1, 1], [], []>} : vector<8x2735xf32>, vector<2735x128xf32>, vector<8x128xf32> -> vector<8x128xf32>
    %c0_3 = arith.constant 0 : index
    %c0_4 = arith.constant 0 : index
    %3 = vector.load %arg3[%c0_3, %c0_4] : memref<1x128xf32, #tpu.memory_space<vmem>>, vector<1x128xf32>
    %4 = vector.broadcast %3 : vector<1x128xf32> to vector<8x128xf32>
    %5 = arith.addf %2, %4 : vector<8x128xf32>
    %cst_5 = arith.constant 0.000000e+00 : f32
    %6 = vector.broadcast %cst_5 : f32 to vector<8x128xf32>
    %7 = arith.maximumf %5, %6 : vector<8x128xf32>
    %c0_6 = arith.constant 0 : index
    %c0_7 = arith.constant 0 : index
    %8 = vector.load %arg4[%c0_6, %c0_7] : memref<128x64xf32, #tpu.memory_space<vmem>>, vector<128x64xf32>
    %cst_8 = arith.constant dense<0.000000e+00> : vector<8x64xf32>
    %9 = tpu.matmul %7, %8, %cst_8 {dimension_numbers = #tpu.dot_dimension_numbers<[1], [0], [0], [1], [0, 0, 1, 1], [], []>} : vector<8x128xf32>, vector<128x64xf32>, vector<8x64xf32> -> vector<8x64xf32>
    %c0_9 = arith.constant 0 : index
    %c0_10 = arith.constant 0 : index
    %10 = vector.load %arg5[%c0_9, %c0_10] : memref<1x64xf32, #tpu.memory_space<vmem>>, vector<1x64xf32>
    %11 = vector.broadcast %10 : vector<1x64xf32> to vector<8x64xf32>
    %12 = arith.addf %9, %11 : vector<8x64xf32>
    %cst_11 = arith.constant 0.000000e+00 : f32
    %13 = vector.broadcast %cst_11 : f32 to vector<8x64xf32>
    %14 = arith.maximumf %12, %13 : vector<8x64xf32>
    %c0_12 = arith.constant 0 : index
    %c0_13 = arith.constant 0 : index
    %15 = vector.load %arg6[%c0_12, %c0_13] : memref<1x64xf32, #tpu.memory_space<vmem>>, vector<1x64xf32>
    %16 = vector.broadcast %15 : vector<1x64xf32> to vector<8x64xf32>
    %17 = arith.mulf %14, %16 : vector<8x64xf32>
    %cst_14 = arith.constant dense<0.000000e+00> : vector<8xf32>
    %18 = vector.multi_reduction <add>, %17, %cst_14 [1] : vector<8x64xf32> to vector<8xf32>
    %19 = vector.shape_cast %18 : vector<8xf32> to vector<8x1xf32>
    %c0_15 = arith.constant 0 : index
    %c0_16 = arith.constant 0 : index
    %20 = vector.load %arg7[%c0_15, %c0_16] : memref<1x1xf32, #tpu.memory_space<vmem>>, vector<1x1xf32>
    %21 = vector.broadcast %20 : vector<1x1xf32> to vector<8x1xf32>
    %22 = arith.addf %19, %21 : vector<8x1xf32>
    %c0_17 = arith.constant 0 : index
    %c0_18 = arith.constant 0 : index
    %23 = vector.load %arg8[%c0_17, %c0_18] : memref<8x1xf32, #tpu.memory_space<vmem>>, vector<8x1xf32>
    tpu.vector_store %arg8[%c0_17, %c0_18], %22 {strides = array<i32>} : memref<8x1xf32, #tpu.memory_space<vmem>>, vector<8x1xf32>,
    return
  }
  func.func @transform_0(%arg0: i32) -> (i32, i32) {
    %c0_i32 = arith.constant 0 : i32
    %c0_i32_0 = arith.constant 0 : i32
    return %arg0, %c0_i32 : i32, i32
  }
  func.func @transform_1(%arg0: i32) -> (i32, i32) {
    %c0_i32 = arith.constant 0 : i32
    %c0_i32_0 = arith.constant 0 : i32
    %c0_i32_1 = arith.constant 0 : i32
    return %c0_i32, %c0_i32_0 : i32, i32
  }
  func.func @transform_2(%arg0: i32) -> (i32, i32) {
    %c0_i32 = arith.constant 0 : i32
    %c0_i32_0 = arith.constant 0 : i32
    %c0_i32_1 = arith.constant 0 : i32
    return %c0_i32, %c0_i32_0 : i32, i32
  }
  func.func @transform_3(%arg0: i32) -> (i32, i32) {
    %c0_i32 = arith.constant 0 : i32
    %c0_i32_0 = arith.constant 0 : i32
    %c0_i32_1 = arith.constant 0 : i32
    return %c0_i32, %c0_i32_0 : i32, i32
  }
  func.func @transform_4(%arg0: i32) -> (i32, i32) {
    %c0_i32 = arith.constant 0 : i32
    %c0_i32_0 = arith.constant 0 : i32
    %c0_i32_1 = arith.constant 0 : i32
    return %c0_i32, %c0_i32_0 : i32, i32
  }
  func.func @transform_5(%arg0: i32) -> (i32, i32) {
    %c0_i32 = arith.constant 0 : i32
    %c0_i32_0 = arith.constant 0 : i32
    %c0_i32_1 = arith.constant 0 : i32
    return %c0_i32, %c0_i32_0 : i32, i32
  }
  func.func @transform_6(%arg0: i32) -> (i32, i32) {
    %c0_i32 = arith.constant 0 : i32
    %c0_i32_0 = arith.constant 0 : i32
    %c0_i32_1 = arith.constant 0 : i32
    return %c0_i32, %c0_i32_0 : i32, i32
  }
  func.func @transform_7(%arg0: i32) -> (i32, i32) {
    %c0_i32 = arith.constant 0 : i32
    %c0_i32_0 = arith.constant 0 : i32
    return %arg0, %c0_i32 : i32, i32
  }
}

</mosaic_0001>

<llo_original>
// kernel: tpu_custom_call.1
$region0: #{tpu_custom_call.1}
  #allocation0 [shape = 'u32[]', space=smem, size = 0x4, offset = 0x4, fixed_abs, tag = 'smem constant byte address 0x4 - core index']
  #allocation1 [shape = 'u32[144,128]{1,0:T(1,128)}', space=vmem, size = 0x12000, scoped, tag = 'internal scratch']
  #allocation2 [shape = 'f32[1,1]{1,0:T(1,128)S(1)}', space=vmem, size = 0x200, scoped, tag = 'scoped memory for tpu_custom_call.1']
  %s0 = inlined_call_operand.hbm [shape: f32[8,2735], index: 0, kind: input, shape index: {}]
  %s1 = inlined_call_operand.hbm [shape: f32[2735,128], index: 1, kind: input, shape index: {}]
  %s2 = inlined_call_operand.hbm [shape: f32[1,128], index: 2, kind: input, shape index: {}]
  %s3 = inlined_call_operand.vmem [shape: f32[128,64], index: 3, kind: input, shape index: {}]
  %s4 = inlined_call_operand.hbm [shape: f32[1,64], index: 4, kind: input, shape index: {}]
  %s5 = inlined_call_operand.hbm [shape: f32[1,64], index: 5, kind: input, shape index: {}]
  %s6 = inlined_call_operand.<no memory space> [shape: f32[1,1], index: 6, kind: input, shape index: {}]
  %s7 = inlined_call_operand.vmem [shape: f32[8,1], index: 7, kind: output, shape index: {}]
  %s8 = sld [smem:[#allocation0]]
  $region58: #{tpu_custom_call.1} parent=0
    _
  %s10 = ssub.s32 1, %s8
  %s11 = scalar_select 0, %s10, %s8
  %v12 = vstv %s6
  %13 = vst [vmem:[#allocation2] sm:$0x1] %v12
  $region1: #{tpu_custom_call.1} parent=0
    #allocation3 [shape = 'u8[90112]{0}', space=vmem, size = 0x16000, scoped, tag = 'input window, operand 0, single buffered']
    #allocation4 [shape = 's32[1]{0}', space=sflag, size = 0x4, scoped, tag = 'scoped memory for tpu_custom_call.1']
    #allocation5 [shape = 'u8[1400832]{0}', space=vmem, size = 0x156000, scoped, tag = 'input window, operand 1, single buffered']
    #allocation6 [shape = 's32[1]{0}', space=sflag, size = 0x4, scoped, tag = 'scoped memory for tpu_custom_call.1']
    #allocation7 [shape = 'u8[512]{0}', space=vmem, size = 0x400, scoped, tag = 'input window, operand 2, single buffered']
    #allocation8 [shape = 'u8[512]{0}', space=vmem, size = 0x400, scoped, tag = 'input window, operand 4, single buffered']
    #allocation9 [shape = 's32[1]{0}', space=sflag, size = 0x4, scoped, tag = 'scoped memory for tpu_custom_call.1']
    #allocation10 [shape = 'u8[512]{0}', space=vmem, size = 0x400, scoped, tag = 'input window, operand 5, single buffered']
    %14 = vsyncpa [#allocation4], 0
    %15 = vsyncpa [#allocation6], 0
    %16 = vsyncpa [#allocation9], 0
    // Predicated region
    $region2: #{tpu_custom_call.1} parent=1 // pred_check
      _
    $region3: #{tpu_custom_call.1} parent=1 // pred_check_branch
      %18 = sbr.rel (0) target = $region5
    $region4: #{tpu_custom_call.1} parent=1 // pred_region
      %s20 = ssub.s32 2816, 2816
      %21 = vsyncadd [#allocation4], %s20
      %s23 = sshll.u32 [#allocation3], 4
      %s24 = int_to_ptr.vmem [resolvable:$true] %s23
      %26 = dma.hbm_to_vmem [thread:$0]  %s0, 2816, %s24, [#allocation4]
    $region5: #{tpu_custom_call.1} parent=1 // pred_fallthru
      _
    // Predicated region
    $region6: #{tpu_custom_call.1} parent=1 // pred_check
      _
    $region7: #{tpu_custom_call.1} parent=1 // pred_check_branch
      %28 = sbr.rel (0) target = $region9
    $region8: #{tpu_custom_call.1} parent=1 // pred_region
      %s30 = ssub.s32 43776, 43776
      %31 = vsyncadd [#allocation6], %s30
      %s32 = sshll.u32 [#allocation5], 4
      %s33 = int_to_ptr.vmem [resolvable:$true] %s32
      %38 = dma.hbm_to_vmem [thread:$0]  %s1, 43776, %s33, [#allocation6], 128, 128, 8
    $region9: #{tpu_custom_call.1} parent=1 // pred_fallthru
      _
    // Predicated region
    $region10: #{tpu_custom_call.1} parent=1 // pred_check
      _
    $region11: #{tpu_custom_call.1} parent=1 // pred_check_branch
      %40 = sbr.rel (0) target = $region13
    $region12: #{tpu_custom_call.1} parent=1 // pred_region
      %s42 = ssub.s32 16, 16
      %43 = vsyncadd [#allocation6], %s42
      %s45 = sshll.u32 [#allocation7], 4
      %s46 = int_to_ptr.vmem [resolvable:$true] %s45
      %48 = dma.hbm_to_vmem [thread:$0]  %s2, 16, %s46, [#allocation6]
    $region13: #{tpu_custom_call.1} parent=1 // pred_fallthru
      _
    // Predicated region
    $region14: #{tpu_custom_call.1} parent=1 // pred_check
      _
    $region15: #{tpu_custom_call.1} parent=1 // pred_check_branch
      %50 = sbr.rel (0) target = $region17
    $region16: #{tpu_custom_call.1} parent=1 // pred_region
      _
    $region17: #{tpu_custom_call.1} parent=1 // pred_fallthru
      _
    // Predicated region
    $region18: #{tpu_custom_call.1} parent=1 // pred_check
      _
    $region19: #{tpu_custom_call.1} parent=1 // pred_check_branch
      %52 = sbr.rel (0) target = $region21
    $region20: #{tpu_custom_call.1} parent=1 // pred_region
      %s54 = ssub.s32 16, 16
      %55 = vsyncadd [#allocation9], %s54
      %s57 = sshll.u32 [#allocation8], 4
      %s58 = int_to_ptr.vmem [resolvable:$true] %s57
      %60 = dma.hbm_to_vmem [thread:$0]  %s4, 16, %s58, [#allocation9]
    $region21: #{tpu_custom_call.1} parent=1 // pred_fallthru
      _
    // Predicated region
    $region22: #{tpu_custom_call.1} parent=1 // pred_check
      _
    $region23: #{tpu_custom_call.1} parent=1 // pred_check_branch
      %62 = sbr.rel (0) target = $region25
    $region24: #{tpu_custom_call.1} parent=1 // pred_region
      %s64 = ssub.s32 16, 16
      %65 = vsyncadd [#allocation9], %s64
      %s67 = sshll.u32 [#allocation10], 4
      %s68 = int_to_ptr.vmem [resolvable:$true] %s67
      %70 = dma.hbm_to_vmem [thread:$0]  %s5, 16, %s68, [#allocation9]
    $region25: #{tpu_custom_call.1} parent=1 // pred_fallthru
      _
    // Predicated region
    $region26: #{tpu_custom_call.1} parent=1 // pred_check
      _
    $region27: #{tpu_custom_call.1} parent=1 // pred_check_branch
      %72 = sbr.rel (0) target = $region29
    $region28: #{tpu_custom_call.1} parent=1 // pred_region
      _
    $region29: #{tpu_custom_call.1} parent=1 // pred_fallthru
      _
    // Predicated region
    $region30: #{tpu_custom_call.1} parent=1 // pred_check
      _
    $region31: #{tpu_custom_call.1} parent=1 // pred_check_branch
      %74 = sbr.rel (0) target = $region33
    $region32: #{tpu_custom_call.1} parent=1 // pred_region
      %75 = dma.done [#allocation4], 2816
    $region33: #{tpu_custom_call.1} parent=1 // pred_fallthru
      _
    // Predicated region
    $region34: #{tpu_custom_call.1} parent=1 // pred_check
      _
    $region35: #{tpu_custom_call.1} parent=1 // pred_check_branch
      %77 = sbr.rel (0) target = $region37
    $region36: #{tpu_custom_call.1} parent=1 // pred_region
      %78 = dma.done [#allocation6], 43776
    $region37: #{tpu_custom_call.1} parent=1 // pred_fallthru
      _
    // Predicated region
    $region38: #{tpu_custom_call.1} parent=1 // pred_check
      _
    $region39: #{tpu_custom_call.1} parent=1 // pred_check_branch
      %80 = sbr.rel (0) target = $region41
    $region40: #{tpu_custom_call.1} parent=1 // pred_region
      %81 = dma.done [#allocation6], 16
    $region41: #{tpu_custom_call.1} parent=1 // pred_fallthru
      _
    // Predicated region
    $region42: #{tpu_custom_call.1} parent=1 // pred_check
      _
    $region43: #{tpu_custom_call.1} parent=1 // pred_check_branch
      %83 = sbr.rel (0) target = $region45
    $region44: #{tpu_custom_call.1} parent=1 // pred_region
      %84 = dma.done [#allocation9], 16
    $region45: #{tpu_custom_call.1} parent=1 // pred_fallthru
      _
    // Predicated region
    $region46: #{tpu_custom_call.1} parent=1 // pred_check
      _
    $region47: #{tpu_custom_call.1} parent=1 // pred_check_branch
      %86 = sbr.rel (0) target = $region49
    $region48: #{tpu_custom_call.1} parent=1 // pred_region
      %87 = dma.done [#allocation9], 16
    $region49: #{tpu_custom_call.1} parent=1 // pred_fallthru
      _
    %v88 = vld [vmem:[#allocation3] sm:$0xff]
    %v89 = vld [vmem:[#allocation3 + $0x8] sm:$0xff]
    %v90 = vld [vmem:[#allocation3 + $0x10] sm:$0xff]
    %v91 = vld [vmem:[#allocation3 + $0x18] sm:$0xff]
    %v92 = vld [vmem:[#allocation3 + $0x20] sm:$0xff]
    %v93 = vld [vmem:[#allocation3 + $0x28] sm:$0xff]
    %v94 = vld [vmem:[#allocation3 + $0x30] sm:$0xff]
    %v95 = vld [vmem:[#allocation3 + $0x38] sm:$0xff]
    %v96 = vld [vmem:[#allocation3 + $0x40] sm:$0xff]
    %v97 = vld [vmem:[#allocation3 + $0x48] sm:$0xff]
    %v98 = vld [vmem:[#allocation3 + $0x50] sm:$0xff]
    %v99 = vld [vmem:[#allocation3 + $0x58] sm:$0xff]
    %v100 = vld [vmem:[#allocation3 + $0x60] sm:$0xff]
    %v101 = vld [vmem:[#allocation3 + $0x68] sm:$0xff]
    %v102 = vld [vmem:[#allocation3 + $0x70] sm:$0xff]
    %v103 = vld [vmem:[#allocation3 + $0x78] sm:$0xff]
    %v104 = vld [vmem:[#allocation3 + $0x80] sm:$0xff]
    %v105 = vld [vmem:[#allocation3 + $0x88] sm:$0xff]
    %v106 = vld [vmem:[#allocation3 + $0x90] sm:$0xff]
    %v107 = vld [vmem:[#allocation3 + $0x98] sm:$0xff]
    %v108 = vld [vmem:[#allocation3 + $0xa0] sm:$0xff]
    %v109 = vld [vmem:[#allocation3 + $0xa8] sm:$0xff]
    %v110 = vld [vmem:[#allocation5] sm:$0xff]
    %v111 = vld [vmem:[#allocation5 + $0x8] sm:$0xff]
    %v112 = vld [vmem:[#allocation5 + $0x10] sm:$0xff]
    %v113 = vld [vmem:[#allocation5 + $0x18] sm:$0xff]
    %v114 = vld [vmem:[#allocation5 + $0x20] sm:$0xff]
    %v115 = vld [vmem:[#allocation5 + $0x28] sm:$0xff]
    %v116 = vld [vmem:[#allocation5 + $0x30] sm:$0xff]
    %v117 = vld [vmem:[#allocation5 + $0x38] sm:$0xff]
    %v118 = vld [vmem:[#allocation5 + $0x40] sm:$0xff]
    %v119 = vld [vmem:[#allocation5 + $0x48] sm:$0xff]
    %v120 = vld [vmem:[#allocation5 + $0x50] sm:$0xff]
    %v121 = vld [vmem:[#allocation5 + $0x58] sm:$0xff]
    %v122 = vld [vmem:[#allocation5 + $0x60] sm:$0xff]
    %v123 = vld [vmem:[#allocation5 + $0x68] sm:$0xff]
    %v124 = vld [vmem:[#allocation5 + $0x70] sm:$0xff]
    %v125 = vld [vmem:[#allocation5 + $0x78] sm:$0xff]
    %v126 = vld [vmem:[#allocation5 + $0x80] sm:$0xff]
    %v127 = vld [vmem:[#allocation5 + $0x88] sm:$0xff]
    %v128 = vld [vmem:[#allocation5 + $0x90] sm:$0xff]
    %v129 = vld [vmem:[#allocation5 + $0x98] sm:$0xff]
    %v130 = vld [vmem:[#allocation5 + $0xa0] sm:$0xff]
    %v131 = vld [vmem:[#allocation5 + $0xa8] sm:$0xff]
    %v132 = vld [vmem:[#allocation5 + $0xb0] sm:$0xff]
    %v133 = vld [vmem:[#allocation5 + $0xb8] sm:$0xff]
    %v134 = vld [vmem:[#allocation5 + $0xc0] sm:$0xff]
    %v135 = vld [vmem:[#allocation5 + $0xc8] sm:$0xff]
    %v136 = vld [vmem:[#allocation5 + $0xd0] sm:$0xff]
    %v137 = vld [vmem:[#allocation5 + $0xd8] sm:$0xff]
    %v138 = vld [vmem:[#allocation5 + $0xe0] sm:$0xff]
    %v139 = vld [vmem:[#allocation5 + $0xe8] sm:$0xff]
    %v140 = vld [vmem:[#allocation5 + $0xf0] sm:$0xff]
    %v141 = vld [vmem:[#allocation5 + $0xf8] sm:$0xff]
    %v142 = vld [vmem:[#allocation5 + $0x100] sm:$0xff]
    %v143 = vld [vmem:[#allocation5 + $0x108] sm:$0xff]
    %v144 = vld [vmem:[#allocation5 + $0x110] sm:$0xff]
    %v145 = vld [vmem:[#allocation5 + $0x118] sm:$0xff]
    %v146 = vld [vmem:[#allocation5 + $0x120] sm:$0xff]
    %v147 = vld [vmem:[#allocation5 + $0x128] sm:$0xff]
    %v148 = vld [vmem:[#allocation5 + $0x130] sm:$0xff]
    %v149 = vld [vmem:[#allocation5 + $0x138] sm:$0xff]
    %v150 = vld [vmem:[#allocation5 + $0x140] sm:$0xff]
    %v151 = vld [vmem:[#allocation5 + $0x148] sm:$0xff]
    %v152 = vld [vmem:[#allocation5 + $0x150] sm:$0xff]
    %v153 = vld [vmem:[#allocation5 + $0x158] sm:$0xff]
    %v154 = vld [vmem:[#allocation5 + $0x160] sm:$0xff]
    %v155 = vld [vmem:[#allocation5 + $0x168] sm:$0xff]
    %v156 = vld [vmem:[#allocation5 + $0x170] sm:$0xff]
    %v157 = vld [vmem:[#allocation5 + $0x178] sm:$0xff]
    %v158 = vld [vmem:[#allocation5 + $0x180] sm:$0xff]
    %v159 = vld [vmem:[#allocation5 + $0x188] sm:$0xff]
    %v160 = vld [vmem:[#allocation5 + $0x190] sm:$0xff]
    %v161 = vld [vmem:[#allocation5 + $0x198] sm:$0xff]
    %v162 = vld [vmem:[#allocation5 + $0x1a0] sm:$0xff]
    %v163 = vld [vmem:[#allocation5 + $0x1a8] sm:$0xff]
    %v164 = vld [vmem:[#allocation5 + $0x1b0] sm:$0xff]
    %v165 = vld [vmem:[#allocation5 + $0x1b8] sm:$0xff]
    %v166 = vld [vmem:[#allocation5 + $0x1c0] sm:$0xff]
    %v167 = vld [vmem:[#allocation5 + $0x1c8] sm:$0xff]
    %v168 = vld [vmem:[#allocation5 + $0x1d0] sm:$0xff]
    %v169 = vld [vmem:[#allocation5 + $0x1d8] sm:$0xff]
    %v170 = vld [vmem:[#allocation5 + $0x1e0] sm:$0xff]
    %v171 = vld [vmem:[#allocation5 + $0x1e8] sm:$0xff]
    %v172 = vld [vmem:[#allocation5 + $0x1f0] sm:$0xff]
    %v173 = vld [vmem:[#allocation5 + $0x1f8] sm:$0xff]
    %v174 = vld [vmem:[#allocation5 + $0x200] sm:$0xff]
    %v175 = vld [vmem:[#allocation5 + $0x208] sm:$0xff]
    %v176 = vld [vmem:[#allocation5 + $0x210] sm:$0xff]
    %v177 = vld [vmem:[#allocation5 + $0x218] sm:$0xff]
    %v178 = vld [vmem:[#allocation5 + $0x220] sm:$0xff]
    %v179 = vld [vmem:[#allocation5 + $0x228] sm:$0xff]
    %v180 = vld [vmem:[#allocation5 + $0x230] sm:$0xff]
    %v181 = vld [vmem:[#allocation5 + $0x238] sm:$0xff]
    %v182 = vld [vmem:[#allocation5 + $0x240] sm:$0xff]
    %v183 = vld [vmem:[#allocation5 + $0x248] sm:$0xff]
    %v184 = vld [vmem:[#allocation5 + $0x250] sm:$0xff]
    %v185 = vld [vmem:[#allocation5 + $0x258] sm:$0xff]
    %v186 = vld [vmem:[#allocation5 + $0x260] sm:$0xff]
    %v187 = vld [vmem:[#allocation5 + $0x268] sm:$0xff]
    %v188 = vld [vmem:[#allocation5 + $0x270] sm:$0xff]
    %v189 = vld [vmem:[#allocation5 + $0x278] sm:$0xff]
    %v190 = vld [vmem:[#allocation5 + $0x280] sm:$0xff]
    %v191 = vld [vmem:[#allocation5 + $0x288] sm:$0xff]
    %v192 = vld [vmem:[#allocation5 + $0x290] sm:$0xff]
    %v193 = vld [vmem:[#allocation5 + $0x298] sm:$0xff]
    %v194 = vld [vmem:[#allocation5 + $0x2a0] sm:$0xff]
    %v195 = vld [vmem:[#allocation5 + $0x2a8] sm:$0xff]
    %v196 = vld [vmem:[#allocation5 + $0x2b0] sm:$0xff]
    %v197 = vld [vmem:[#allocation5 + $0x2b8] sm:$0xff]
    %v198 = vld [vmem:[#allocation5 + $0x2c0] sm:$0xff]
    %v199 = vld [vmem:[#allocation5 + $0x2c8] sm:$0xff]
    %v200 = vld [vmem:[#allocation5 + $0x2d0] sm:$0xff]
    %v201 = vld [vmem:[#allocation5 + $0x2d8] sm:$0xff]
    %v202 = vld [vmem:[#allocation5 + $0x2e0] sm:$0xff]
    %v203 = vld [vmem:[#allocation5 + $0x2e8] sm:$0xff]
    %v204 = vld [vmem:[#allocation5 + $0x2f0] sm:$0xff]
    %v205 = vld [vmem:[#allocation5 + $0x2f8] sm:$0xff]
    %v206 = vld [vmem:[#allocation5 + $0x300] sm:$0xff]
    %v207 = vld [vmem:[#allocation5 + $0x308] sm:$0xff]
    %v208 = vld [vmem:[#allocation5 + $0x310] sm:$0xff]
    %v209 = vld [vmem:[#allocation5 + $0x318] sm:$0xff]
    %v210 = vld [vmem:[#allocation5 + $0x320] sm:$0xff]
    %v211 = vld [vmem:[#allocation5 + $0x328] sm:$0xff]
    %v212 = vld [vmem:[#allocation5 + $0x330] sm:$0xff]
    %v213 = vld [vmem:[#allocation5 + $0x338] sm:$0xff]
    %v214 = vld [vmem:[#allocation5 + $0x340] sm:$0xff]
    %v215 = vld [vmem:[#allocation5 + $0x348] sm:$0xff]
    %v216 = vld [vmem:[#allocation5 + $0x350] sm:$0xff]
    %v217 = vld [vmem:[#allocation5 + $0x358] sm:$0xff]
    %v218 = vld [vmem:[#allocation5 + $0x360] sm:$0xff]
    %v219 = vld [vmem:[#allocation5 + $0x368] sm:$0xff]
    %v220 = vld [vmem:[#allocation5 + $0x370] sm:$0xff]
    %v221 = vld [vmem:[#allocation5 + $0x378] sm:$0xff]
    %v222 = vld [vmem:[#allocation5 + $0x380] sm:$0xff]
    %v223 = vld [vmem:[#allocation5 + $0x388] sm:$0xff]
    %v224 = vld [vmem:[#allocation5 + $0x390] sm:$0xff]
    %v225 = vld [vmem:[#allocation5 + $0x398] sm:$0xff]
    %v226 = vld [vmem:[#allocation5 + $0x3a0] sm:$0xff]
    %v227 = vld [vmem:[#allocation5 + $0x3a8] sm:$0xff]
    %v228 = vld [vmem:[#allocation5 + $0x3b0] sm:$0xff]
    %v229 = vld [vmem:[#allocation5 + $0x3b8] sm:$0xff]
    %v230 = vld [vmem:[#allocation5 + $0x3c0] sm:$0xff]
    %v231 = vld [vmem:[#allocation5 + $0x3c8] sm:$0xff]
    %v232 = vld [vmem:[#allocation5 + $0x3d0] sm:$0xff]
    %v233 = vld [vmem:[#allocation5 + $0x3d8] sm:$0xff]
    %v234 = vld [vmem:[#allocation5 + $0x3e0] sm:$0xff]
    %v235 = vld [vmem:[#allocation5 + $0x3e8] sm:$0xff]
    %v236 = vld [vmem:[#allocation5 + $0x3f0] sm:$0xff]
    %v237 = vld [vmem:[#allocation5 + $0x3f8] sm:$0xff]
    %v238 = vld [vmem:[#allocation5 + $0x400] sm:$0xff]
    %v239 = vld [vmem:[#allocation5 + $0x408] sm:$0xff]
    %v240 = vld [vmem:[#allocation5 + $0x410] sm:$0xff]
    %v241 = vld [vmem:[#allocation5 + $0x418] sm:$0xff]
    %v242 = vld [vmem:[#allocation5 + $0x420] sm:$0xff]
    %v243 = vld [vmem:[#allocation5 + $0x428] sm:$0xff]
    %v244 = vld [vmem:[#allocation5 + $0x430] sm:$0xff]
    %v245 = vld [vmem:[#allocation5 + $0x438] sm:$0xff]
    %v246 = vld [vmem:[#allocation5 + $0x440] sm:$0xff]
    %v247 = vld [vmem:[#allocation5 + $0x448] sm:$0xff]
    %v248 = vld [vmem:[#allocation5 + $0x450] sm:$0xff]
    %v249 = vld [vmem:[#allocation5 + $0x458] sm:$0xff]
    %v250 = vld [vmem:[#allocation5 + $0x460] sm:$0xff]
    %v251 = vld [vmem:[#allocation5 + $0x468] sm:$0xff]
    %v252 = vld [vmem:[#allocation5 + $0x470] sm:$0xff]
    %v253 = vld [vmem:[#allocation5 + $0x478] sm:$0xff]
    %v254 = vld [vmem:[#allocation5 + $0x480] sm:$0xff]
    %v255 = vld [vmem:[#allocation5 + $0x488] sm:$0xff]
    %v256 = vld [vmem:[#allocation5 + $0x490] sm:$0xff]
    %v257 = vld [vmem:[#allocation5 + $0x498] sm:$0xff]
    %v258 = vld [vmem:[#allocation5 + $0x4a0] sm:$0xff]
    %v259 = vld [vmem:[#allocation5 + $0x4a8] sm:$0xff]
    %v260 = vld [vmem:[#allocation5 + $0x4b0] sm:$0xff]
    %v261 = vld [vmem:[#allocation5 + $0x4b8] sm:$0xff]
    %v262 = vld [vmem:[#allocation5 + $0x4c0] sm:$0xff]
    %v263 = vld [vmem:[#allocation5 + $0x4c8] sm:$0xff]
    %v264 = vld [vmem:[#allocation5 + $0x4d0] sm:$0xff]
    %v265 = vld [vmem:[#allocation5 + $0x4d8] sm:$0xff]
    %v266 = vld [vmem:[#allocation5 + $0x4e0] sm:$0xff]
    %v267 = vld [vmem:[#allocation5 + $0x4e8] sm:$0xff]
    %v268 = vld [vmem:[#allocation5 + $0x4f0] sm:$0xff]
    %v269 = vld [vmem:[#allocation5 + $0x4f8] sm:$0xff]
    %v270 = vld [vmem:[#allocation5 + $0x500] sm:$0xff]
    %v271 = vld [vmem:[#allocation5 + $0x508] sm:$0xff]
    %v272 = vld [vmem:[#allocation5 + $0x510] sm:$0xff]
    %v273 = vld [vmem:[#allocation5 + $0x518] sm:$0xff]
    %v274 = vld [vmem:[#allocation5 + $0x520] sm:$0xff]
    %v275 = vld [vmem:[#allocation5 + $0x528] sm:$0xff]
    %v276 = vld [vmem:[#allocation5 + $0x530] sm:$0xff]
    %v277 = vld [vmem:[#allocation5 + $0x538] sm:$0xff]
    %v278 = vld [vmem:[#allocation5 + $0x540] sm:$0xff]
    %v279 = vld [vmem:[#allocation5 + $0x548] sm:$0xff]
    %v280 = vld [vmem:[#allocation5 + $0x550] sm:$0xff]
    %v281 = vld [vmem:[#allocation5 + $0x558] sm:$0xff]
    %v282 = vld [vmem:[#allocation5 + $0x560] sm:$0xff]
    %v283 = vld [vmem:[#allocation5 + $0x568] sm:$0xff]
    %v284 = vld [vmem:[#allocation5 + $0x570] sm:$0xff]
    %v285 = vld [vmem:[#allocation5 + $0x578] sm:$0xff]
    %v286 = vld [vmem:[#allocation5 + $0x580] sm:$0xff]
    %v287 = vld [vmem:[#allocation5 + $0x588] sm:$0xff]
    %v288 = vld [vmem:[#allocation5 + $0x590] sm:$0xff]
    %v289 = vld [vmem:[#allocation5 + $0x598] sm:$0xff]
    %v290 = vld [vmem:[#allocation5 + $0x5a0] sm:$0xff]
    %v291 = vld [vmem:[#allocation5 + $0x5a8] sm:$0xff]
    %v292 = vld [vmem:[#allocation5 + $0x5b0] sm:$0xff]
    %v293 = vld [vmem:[#allocation5 + $0x5b8] sm:$0xff]
    %v294 = vld [vmem:[#allocation5 + $0x5c0] sm:$0xff]
    %v295 = vld [vmem:[#allocation5 + $0x5c8] sm:$0xff]
    %v296 = vld [vmem:[#allocation5 + $0x5d0] sm:$0xff]
    %v297 = vld [vmem:[#allocation5 + $0x5d8] sm:$0xff]
    %v298 = vld [vmem:[#allocation5 + $0x5e0] sm:$0xff]
    %v299 = vld [vmem:[#allocation5 + $0x5e8] sm:$0xff]
    %v300 = vld [vmem:[#allocation5 + $0x5f0] sm:$0xff]
    %v301 = vld [vmem:[#allocation5 + $0x5f8] sm:$0xff]
    %v302 = vld [vmem:[#allocation5 + $0x600] sm:$0xff]
    %v303 = vld [vmem:[#allocation5 + $0x608] sm:$0xff]
    %v304 = vld [vmem:[#allocation5 + $0x610] sm:$0xff]
    %v305 = vld [vmem:[#allocation5 + $0x618] sm:$0xff]
    %v306 = vld [vmem:[#allocation5 + $0x620] sm:$0xff]
    %v307 = vld [vmem:[#allocation5 + $0x628] sm:$0xff]
    %v308 = vld [vmem:[#allocation5 + $0x630] sm:$0xff]
    %v309 = vld [vmem:[#allocation5 + $0x638] sm:$0xff]
    %v310 = vld [vmem:[#allocation5 + $0x640] sm:$0xff]
    %v311 = vld [vmem:[#allocation5 + $0x648] sm:$0xff]
    %v312 = vld [vmem:[#allocation5 + $0x650] sm:$0xff]
    %v313 = vld [vmem:[#allocation5 + $0x658] sm:$0xff]
    %v314 = vld [vmem:[#allocation5 + $0x660] sm:$0xff]
    %v315 = vld [vmem:[#allocation5 + $0x668] sm:$0xff]
    %v316 = vld [vmem:[#allocation5 + $0x670] sm:$0xff]
    %v317 = vld [vmem:[#allocation5 + $0x678] sm:$0xff]
    %v318 = vld [vmem:[#allocation5 + $0x680] sm:$0xff]
    %v319 = vld [vmem:[#allocation5 + $0x688] sm:$0xff]
    %v320 = vld [vmem:[#allocation5 + $0x690] sm:$0xff]
    %v321 = vld [vmem:[#allocation5 + $0x698] sm:$0xff]
    %v322 = vld [vmem:[#allocation5 + $0x6a0] sm:$0xff]
    %v323 = vld [vmem:[#allocation5 + $0x6a8] sm:$0xff]
    %v324 = vld [vmem:[#allocation5 + $0x6b0] sm:$0xff]
    %v325 = vld [vmem:[#allocation5 + $0x6b8] sm:$0xff]
    %v326 = vld [vmem:[#allocation5 + $0x6c0] sm:$0xff]
    %v327 = vld [vmem:[#allocation5 + $0x6c8] sm:$0xff]
    %v328 = vld [vmem:[#allocation5 + $0x6d0] sm:$0xff]
    %v329 = vld [vmem:[#allocation5 + $0x6d8] sm:$0xff]
    %v330 = vld [vmem:[#allocation5 + $0x6e0] sm:$0xff]
    %v331 = vld [vmem:[#allocation5 + $0x6e8] sm:$0xff]
    %v332 = vld [vmem:[#allocation5 + $0x6f0] sm:$0xff]
    %v333 = vld [vmem:[#allocation5 + $0x6f8] sm:$0xff]
    %v334 = vld [vmem:[#allocation5 + $0x700] sm:$0xff]
    %v335 = vld [vmem:[#allocation5 + $0x708] sm:$0xff]
    %v336 = vld [vmem:[#allocation5 + $0x710] sm:$0xff]
    %v337 = vld [vmem:[#allocation5 + $0x718] sm:$0xff]
    %v338 = vld [vmem:[#allocation5 + $0x720] sm:$0xff]
    %v339 = vld [vmem:[#allocation5 + $0x728] sm:$0xff]
    %v340 = vld [vmem:[#allocation5 + $0x730] sm:$0xff]
    %v341 = vld [vmem:[#allocation5 + $0x738] sm:$0xff]
    %v342 = vld [vmem:[#allocation5 + $0x740] sm:$0xff]
    %v343 = vld [vmem:[#allocation5 + $0x748] sm:$0xff]
    %v344 = vld [vmem:[#allocation5 + $0x750] sm:$0xff]
    %v345 = vld [vmem:[#allocation5 + $0x758] sm:$0xff]
    %v346 = vld [vmem:[#allocation5 + $0x760] sm:$0xff]
    %v347 = vld [vmem:[#allocation5 + $0x768] sm:$0xff]
    %v348 = vld [vmem:[#allocation5 + $0x770] sm:$0xff]
    %v349 = vld [vmem:[#allocation5 + $0x778] sm:$0xff]
    %v350 = vld [vmem:[#allocation5 + $0x780] sm:$0xff]
    %v351 = vld [vmem:[#allocation5 + $0x788] sm:$0xff]
    %v352 = vld [vmem:[#allocation5 + $0x790] sm:$0xff]
    %v353 = vld [vmem:[#allocation5 + $0x798] sm:$0xff]
    %v354 = vld [vmem:[#allocation5 + $0x7a0] sm:$0xff]
    %v355 = vld [vmem:[#allocation5 + $0x7a8] sm:$0xff]
    %v356 = vld [vmem:[#allocation5 + $0x7b0] sm:$0xff]
    %v357 = vld [vmem:[#allocation5 + $0x7b8] sm:$0xff]
    %v358 = vld [vmem:[#allocation5 + $0x7c0] sm:$0xff]
    %v359 = vld [vmem:[#allocation5 + $0x7c8] sm:$0xff]
    %v360 = vld [vmem:[#allocation5 + $0x7d0] sm:$0xff]
    %v361 = vld [vmem:[#allocation5 + $0x7d8] sm:$0xff]
    %v362 = vld [vmem:[#allocation5 + $0x7e0] sm:$0xff]
    %v363 = vld [vmem:[#allocation5 + $0x7e8] sm:$0xff]
    %v364 = vld [vmem:[#allocation5 + $0x7f0] sm:$0xff]
    %v365 = vld [vmem:[#allocation5 + $0x7f8] sm:$0xff]
    %v366 = vld [vmem:[#allocation5 + $0x800] sm:$0xff]
    %v367 = vld [vmem:[#allocation5 + $0x808] sm:$0xff]
    %v368 = vld [vmem:[#allocation5 + $0x810] sm:$0xff]
    %v369 = vld [vmem:[#allocation5 + $0x818] sm:$0xff]
    %v370 = vld [vmem:[#allocation5 + $0x820] sm:$0xff]
    %v371 = vld [vmem:[#allocation5 + $0x828] sm:$0xff]
    %v372 = vld [vmem:[#allocation5 + $0x830] sm:$0xff]
    %v373 = vld [vmem:[#allocation5 + $0x838] sm:$0xff]
    %v374 = vld [vmem:[#allocation5 + $0x840] sm:$0xff]
    %v375 = vld [vmem:[#allocation5 + $0x848] sm:$0xff]
    %v376 = vld [vmem:[#allocation5 + $0x850] sm:$0xff]
    %v377 = vld [vmem:[#allocation5 + $0x858] sm:$0xff]
    %v378 = vld [vmem:[#allocation5 + $0x860] sm:$0xff]
    %v379 = vld [vmem:[#allocation5 + $0x868] sm:$0xff]
    %v380 = vld [vmem:[#allocation5 + $0x870] sm:$0xff]
    %v381 = vld [vmem:[#allocation5 + $0x878] sm:$0xff]
    %v382 = vld [vmem:[#allocation5 + $0x880] sm:$0xff]
    %v383 = vld [vmem:[#allocation5 + $0x888] sm:$0xff]
    %v384 = vld [vmem:[#allocation5 + $0x890] sm:$0xff]
    %v385 = vld [vmem:[#allocation5 + $0x898] sm:$0xff]
    %v386 = vld [vmem:[#allocation5 + $0x8a0] sm:$0xff]
    %v387 = vld [vmem:[#allocation5 + $0x8a8] sm:$0xff]
    %v388 = vld [vmem:[#allocation5 + $0x8b0] sm:$0xff]
    %v389 = vld [vmem:[#allocation5 + $0x8b8] sm:$0xff]
    %v390 = vld [vmem:[#allocation5 + $0x8c0] sm:$0xff]
    %v391 = vld [vmem:[#allocation5 + $0x8c8] sm:$0xff]
    %v392 = vld [vmem:[#allocation5 + $0x8d0] sm:$0xff]
    %v393 = vld [vmem:[#allocation5 + $0x8d8] sm:$0xff]
    %v394 = vld [vmem:[#allocation5 + $0x8e0] sm:$0xff]
    %v395 = vld [vmem:[#allocation5 + $0x8e8] sm:$0xff]
    %v396 = vld [vmem:[#allocation5 + $0x8f0] sm:$0xff]
    %v397 = vld [vmem:[#allocation5 + $0x8f8] sm:$0xff]
    %v398 = vld [vmem:[#allocation5 + $0x900] sm:$0xff]
    %v399 = vld [vmem:[#allocation5 + $0x908] sm:$0xff]
    %v400 = vld [vmem:[#allocation5 + $0x910] sm:$0xff]
    %v401 = vld [vmem:[#allocation5 + $0x918] sm:$0xff]
    %v402 = vld [vmem:[#allocation5 + $0x920] sm:$0xff]
    %v403 = vld [vmem:[#allocation5 + $0x928] sm:$0xff]
    %v404 = vld [vmem:[#allocation5 + $0x930] sm:$0xff]
    %v405 = vld [vmem:[#allocation5 + $0x938] sm:$0xff]
    %v406 = vld [vmem:[#allocation5 + $0x940] sm:$0xff]
    %v407 = vld [vmem:[#allocation5 + $0x948] sm:$0xff]
    %v408 = vld [vmem:[#allocation5 + $0x950] sm:$0xff]
    %v409 = vld [vmem:[#allocation5 + $0x958] sm:$0xff]
    %v410 = vld [vmem:[#allocation5 + $0x960] sm:$0xff]
    %v411 = vld [vmem:[#allocation5 + $0x968] sm:$0xff]
    %v412 = vld [vmem:[#allocation5 + $0x970] sm:$0xff]
    %v413 = vld [vmem:[#allocation5 + $0x978] sm:$0xff]
    %v414 = vld [vmem:[#allocation5 + $0x980] sm:$0xff]
    %v415 = vld [vmem:[#allocation5 + $0x988] sm:$0xff]
    %v416 = vld [vmem:[#allocation5 + $0x990] sm:$0xff]
    %v417 = vld [vmem:[#allocation5 + $0x998] sm:$0xff]
    %v418 = vld [vmem:[#allocation5 + $0x9a0] sm:$0xff]
    %v419 = vld [vmem:[#allocation5 + $0x9a8] sm:$0xff]
    %v420 = vld [vmem:[#allocation5 + $0x9b0] sm:$0xff]
    %v421 = vld [vmem:[#allocation5 + $0x9b8] sm:$0xff]
    %v422 = vld [vmem:[#allocation5 + $0x9c0] sm:$0xff]
    %v423 = vld [vmem:[#allocation5 + $0x9c8] sm:$0xff]
    %v424 = vld [vmem:[#allocation5 + $0x9d0] sm:$0xff]
    %v425 = vld [vmem:[#allocation5 + $0x9d8] sm:$0xff]
    %v426 = vld [vmem:[#allocation5 + $0x9e0] sm:$0xff]
    %v427 = vld [vmem:[#allocation5 + $0x9e8] sm:$0xff]
    %v428 = vld [vmem:[#allocation5 + $0x9f0] sm:$0xff]
    %v429 = vld [vmem:[#allocation5 + $0x9f8] sm:$0xff]
    %v430 = vld [vmem:[#allocation5 + $0xa00] sm:$0xff]
    %v431 = vld [vmem:[#allocation5 + $0xa08] sm:$0xff]
    %v432 = vld [vmem:[#allocation5 + $0xa10] sm:$0xff]
    %v433 = vld [vmem:[#allocation5 + $0xa18] sm:$0xff]
    %v434 = vld [vmem:[#allocation5 + $0xa20] sm:$0xff]
    %v435 = vld [vmem:[#allocation5 + $0xa28] sm:$0xff]
    %v436 = vld [vmem:[#allocation5 + $0xa30] sm:$0xff]
    %v437 = vld [vmem:[#allocation5 + $0xa38] sm:$0xff]
    %v438 = vld [vmem:[#allocation5 + $0xa40] sm:$0xff]
    %v439 = vld [vmem:[#allocation5 + $0xa48] sm:$0xff]
    %v440 = vld [vmem:[#allocation5 + $0xa50] sm:$0xff]
    %v441 = vld [vmem:[#allocation5 + $0xa58] sm:$0xff]
    %v442 = vld [vmem:[#allocation5 + $0xa60] sm:$0xff]
    %v443 = vld [vmem:[#allocation5 + $0xa68] sm:$0xff]
    %v444 = vld [vmem:[#allocation5 + $0xa70] sm:$0xff]
    %v445 = vld [vmem:[#allocation5 + $0xa78] sm:$0xff]
    %v446 = vld [vmem:[#allocation5 + $0xa80] sm:$0xff]
    %v447 = vld [vmem:[#allocation5 + $0xa88] sm:$0xff]
    %v448 = vld [vmem:[#allocation5 + $0xa90] sm:$0xff]
    %v449 = vld [vmem:[#allocation5 + $0xa98] sm:$0xff]
    %v450 = vld [vmem:[#allocation5 + $0xaa0] sm:$0xff]
    %v451 = vld [vmem:[#allocation5 + $0xaa8] sm:$0x7f]
    %v452 = vld [vmem:[#allocation7] sm:$0x1]
    %v454 = vlaneseq
    %v455 = vshrl.u32 %v454, 7
    %v456 = vsub.s32 0, %v455
    %v457 = vrot.slane %v452, %v456
    %vm459 = vcmask 384000
    %v461 = vsel %vm459, %v109, 0
    %vm463 = vcmask 1046528
    %v465 = vsel %vm463, %v451, 0
    %467 = vmatprep.subr.mxu0 0.0
    %468 = vmatpush1.msra.mxu0 %v110
    %469 = vmatprep.subr.mxu0 0.0
    %470 = vmatpush1.msra.mxu0 %v111
    %471 = vmatprep.subr.mxu0 0.0
    %472 = vmatpush1.msra.mxu0 %v112
    %473 = vmatprep.subr.mxu0 0.0
    %474 = vmatpush1.msra.mxu0 %v113
    %475 = vmatprep.subr.mxu0 0.0
    %476 = vmatpush1.msra.mxu0 %v114
    %477 = vmatprep.subr.mxu0 0.0
    %478 = vmatpush1.msra.mxu0 %v115
    %479 = vmatprep.subr.mxu0 0.0
    %480 = vmatpush1.msra.mxu0 %v116
    %481 = vmatprep.subr.mxu0 0.0
    %482 = vmatpush1.msra.mxu0 %v117
    %483 = vmatprep.subr.mxu0 0.0
    %484 = vmatpush1.msra.mxu0 %v118
    %485 = vmatprep.subr.mxu0 0.0
    %486 = vmatpush1.msra.mxu0 %v119
    %487 = vmatprep.subr.mxu0 0.0
    %488 = vmatpush1.msra.mxu0 %v120
    %489 = vmatprep.subr.mxu0 0.0
    %490 = vmatpush1.msra.mxu0 %v121
    %491 = vmatprep.subr.mxu0 0.0
    %492 = vmatpush1.msra.mxu0 %v122
    %493 = vmatprep.subr.mxu0 0.0
    %494 = vmatpush1.msra.mxu0 %v123
    %495 = vmatprep.subr.mxu0 0.0
    %496 = vmatpush1.msra.mxu0 %v124
    %497 = vmatprep.subr.mxu0 0.0
    %498 = vmatpush1.msra.mxu0 %v125
    %499 = vmatprep.subr.mxu0 0.0
    %500 = vmatpush1.msra.mxu0 %v126
    %501 = vmatprep.subr.mxu0 0.0
    %502 = vmatpush1.msra.mxu0 %v127
    %503 = vmatprep.subr.mxu0 0.0
    %504 = vmatpush1.msra.mxu0 %v128
    %505 = vmatprep.subr.mxu0 0.0
    %506 = vmatpush1.msra.mxu0 %v129
    %507 = vmatprep.subr.mxu0 0.0
    %508 = vmatpush1.msra.mxu0 %v130
    %509 = vmatprep.subr.mxu0 0.0
    %510 = vmatpush1.msra.mxu0 %v131
    %511 = vmatprep.subr.mxu0 0.0
    %512 = vmatpush1.msra.mxu0 %v132
    %513 = vmatprep.subr.mxu0 0.0
    %514 = vmatpush1.msra.mxu0 %v133
    %515 = vmatprep.subr.mxu0 0.0
    %516 = vmatpush1.msra.mxu0 %v134
    %517 = vmatprep.subr.mxu0 0.0
    %518 = vmatpush1.msra.mxu0 %v135
    %519 = vmatprep.subr.mxu0 0.0
    %520 = vmatpush1.msra.mxu0 %v136
    %521 = vmatprep.subr.mxu0 0.0
    %522 = vmatpush1.msra.mxu0 %v137
    %523 = vmatprep.subr.mxu0 0.0
    %524 = vmatpush1.msra.mxu0 %v138
    %525 = vmatprep.subr.mxu0 0.0
    %526 = vmatpush1.msra.mxu0 %v139
    %527 = vmatprep.subr.mxu0 0.0
    %528 = vmatpush1.msra.mxu0 %v140
    %529 = vmatprep.subr.mxu0 0.0
    %530 = vmatpush1.msra.mxu0 %v141
    %531 = vmatprep.mubr.f32.mxu0 %v89
    %532 = vmatmul.mubr.f32.gmra.mrb[0].mxu0 %v88
    %v533 = vpop.f32.mrb[0].mxu0
    %v534 = vadd.f32 %v457, %v533
    %v535 = vpop.f32.mrb[0].mxu0
    %536 = vdwg.mxu0
    %537 = vmatprep.subr.mxu0 0.0
    %538 = vmatpush1.msra.mxu0 %v142
    %539 = vmatprep.subr.mxu0 0.0
    %540 = vmatpush1.msra.mxu0 %v143
    %541 = vmatprep.subr.mxu0 0.0
    %542 = vmatpush1.msra.mxu0 %v144
    %543 = vmatprep.subr.mxu0 0.0
    %544 = vmatpush1.msra.mxu0 %v145
    %545 = vmatprep.subr.mxu0 0.0
    %546 = vmatpush1.msra.mxu0 %v146
    %547 = vmatprep.subr.mxu0 0.0
    %548 = vmatpush1.msra.mxu0 %v147
    %549 = vmatprep.subr.mxu0 0.0
    %550 = vmatpush1.msra.mxu0 %v148
    %551 = vmatprep.subr.mxu0 0.0
    %552 = vmatpush1.msra.mxu0 %v149
    %553 = vmatprep.subr.mxu0 0.0
    %554 = vmatpush1.msra.mxu0 %v150
    %555 = vmatprep.subr.mxu0 0.0
    %556 = vmatpush1.msra.mxu0 %v151
    %557 = vmatprep.subr.mxu0 0.0
    %558 = vmatpush1.msra.mxu0 %v152
    %559 = vmatprep.subr.mxu0 0.0
    %560 = vmatpush1.msra.mxu0 %v153
    %561 = vmatprep.subr.mxu0 0.0
    %562 = vmatpush1.msra.mxu0 %v154
    %563 = vmatprep.subr.mxu0 0.0
    %564 = vmatpush1.msra.mxu0 %v155
    %565 = vmatprep.subr.mxu0 0.0
    %566 = vmatpush1.msra.mxu0 %v156
    %567 = vmatprep.subr.mxu0 0.0
    %568 = vmatpush1.msra.mxu0 %v157
    %569 = vmatprep.subr.mxu0 0.0
    %570 = vmatpush1.msra.mxu0 %v158
    %571 = vmatprep.subr.mxu0 0.0
    %572 = vmatpush1.msra.mxu0 %v159
    %573 = vmatprep.subr.mxu0 0.0
    %574 = vmatpush1.msra.mxu0 %v160
    %575 = vmatprep.subr.mxu0 0.0
    %576 = vmatpush1.msra.mxu0 %v161
    %577 = vmatprep.subr.mxu0 0.0
    %578 = vmatpush1.msra.mxu0 %v162
    %579 = vmatprep.subr.mxu0 0.0
    %580 = vmatpush1.msra.mxu0 %v163
    %581 = vmatprep.subr.mxu0 0.0
    %582 = vmatpush1.msra.mxu0 %v164
    %583 = vmatprep.subr.mxu0 0.0
    %584 = vmatpush1.msra.mxu0 %v165
    %585 = vmatprep.subr.mxu0 0.0
    %586 = vmatpush1.msra.mxu0 %v166
    %587 = vmatprep.subr.mxu0 0.0
    %588 = vmatpush1.msra.mxu0 %v167
    %589 = vmatprep.subr.mxu0 0.0
    %590 = vmatpush1.msra.mxu0 %v168
    %591 = vmatprep.subr.mxu0 0.0
    %592 = vmatpush1.msra.mxu0 %v169
    %593 = vmatprep.subr.mxu0 0.0
    %594 = vmatpush1.msra.mxu0 %v170
    %595 = vmatprep.subr.mxu0 0.0
    %596 = vmatpush1.msra.mxu0 %v171
    %597 = vmatprep.subr.mxu0 0.0
    %598 = vmatpush1.msra.mxu0 %v172
    %599 = vmatprep.subr.mxu0 0.0
    %600 = vmatpush1.msra.mxu0 %v173
    %601 = vmatprep.mubr.f32.mxu0 %v91
    %602 = vmatmul.mubr.f32.gmra.mrb[0].mxu0 %v90
    %v603 = vpop.f32.mrb[0].mxu0
    %v604 = vadd.f32 %v534, %v603
    %v605 = vpop.f32.mrb[0].mxu0
    %606 = vdwg.mxu0
    %607 = vmatprep.subr.mxu0 0.0
    %608 = vmatpush1.msra.mxu0 %v174
    %609 = vmatprep.subr.mxu0 0.0
    %610 = vmatpush1.msra.mxu0 %v175
    %611 = vmatprep.subr.mxu0 0.0
    %612 = vmatpush1.msra.mxu0 %v176
    %613 = vmatprep.subr.mxu0 0.0
    %614 = vmatpush1.msra.mxu0 %v177
    %615 = vmatprep.subr.mxu0 0.0
    %616 = vmatpush1.msra.mxu0 %v178
    %617 = vmatprep.subr.mxu0 0.0
    %618 = vmatpush1.msra.mxu0 %v179
    %619 = vmatprep.subr.mxu0 0.0
    %620 = vmatpush1.msra.mxu0 %v180
    %621 = vmatprep.subr.mxu0 0.0
    %622 = vmatpush1.msra.mxu0 %v181
    %623 = vmatprep.subr.mxu0 0.0
    %624 = vmatpush1.msra.mxu0 %v182
    %625 = vmatprep.subr.mxu0 0.0
    %626 = vmatpush1.msra.mxu0 %v183
    %627 = vmatprep.subr.mxu0 0.0
    %628 = vmatpush1.msra.mxu0 %v184
    %629 = vmatprep.subr.mxu0 0.0
    %630 = vmatpush1.msra.mxu0 %v185
    %631 = vmatprep.subr.mxu0 0.0
    %632 = vmatpush1.msra.mxu0 %v186
    %633 = vmatprep.subr.mxu0 0.0
    %634 = vmatpush1.msra.mxu0 %v187
    %635 = vmatprep.subr.mxu0 0.0
    %636 = vmatpush1.msra.mxu0 %v188
    %637 = vmatprep.subr.mxu0 0.0
    %638 = vmatpush1.msra.mxu0 %v189
    %639 = vmatprep.subr.mxu0 0.0
    %640 = vmatpush1.msra.mxu0 %v190
    %641 = vmatprep.subr.mxu0 0.0
    %642 = vmatpush1.msra.mxu0 %v191
    %643 = vmatprep.subr.mxu0 0.0
    %644 = vmatpush1.msra.mxu0 %v192
    %645 = vmatprep.subr.mxu0 0.0
    %646 = vmatpush1.msra.mxu0 %v193
    %647 = vmatprep.subr.mxu0 0.0
    %648 = vmatpush1.msra.mxu0 %v194
    %649 = vmatprep.subr.mxu0 0.0
    %650 = vmatpush1.msra.mxu0 %v195
    %651 = vmatprep.subr.mxu0 0.0
    %652 = vmatpush1.msra.mxu0 %v196
    %653 = vmatprep.subr.mxu0 0.0
    %654 = vmatpush1.msra.mxu0 %v197
    %655 = vmatprep.subr.mxu0 0.0
    %656 = vmatpush1.msra.mxu0 %v198
    %657 = vmatprep.subr.mxu0 0.0
    %658 = vmatpush1.msra.mxu0 %v199
    %659 = vmatprep.subr.mxu0 0.0
    %660 = vmatpush1.msra.mxu0 %v200
    %661 = vmatprep.subr.mxu0 0.0
    %662 = vmatpush1.msra.mxu0 %v201
    %663 = vmatprep.subr.mxu0 0.0
    %664 = vmatpush1.msra.mxu0 %v202
    %665 = vmatprep.subr.mxu0 0.0
    %666 = vmatpush1.msra.mxu0 %v203
    %667 = vmatprep.subr.mxu0 0.0
    %668 = vmatpush1.msra.mxu0 %v204
    %669 = vmatprep.subr.mxu0 0.0
    %670 = vmatpush1.msra.mxu0 %v205
    %671 = vmatprep.mubr.f32.mxu0 %v93
    %672 = vmatmul.mubr.f32.gmra.mrb[0].mxu0 %v92
    %v673 = vpop.f32.mrb[0].mxu0
    %v674 = vadd.f32 %v604, %v673
    %v675 = vpop.f32.mrb[0].mxu0
    %676 = vdwg.mxu0
    %677 = vmatprep.subr.mxu0 0.0
    %678 = vmatpush1.msra.mxu0 %v206
    %679 = vmatprep.subr.mxu0 0.0
    %680 = vmatpush1.msra.mxu0 %v207
    %681 = vmatprep.subr.mxu0 0.0
    %682 = vmatpush1.msra.mxu0 %v208
    %683 = vmatprep.subr.mxu0 0.0
    %684 = vmatpush1.msra.mxu0 %v209
    %685 = vmatprep.subr.mxu0 0.0
    %686 = vmatpush1.msra.mxu0 %v210
    %687 = vmatprep.subr.mxu0 0.0
    %688 = vmatpush1.msra.mxu0 %v211
    %689 = vmatprep.subr.mxu0 0.0
    %690 = vmatpush1.msra.mxu0 %v212
    %691 = vmatprep.subr.mxu0 0.0
    %692 = vmatpush1.msra.mxu0 %v213
    %693 = vmatprep.subr.mxu0 0.0
    %694 = vmatpush1.msra.mxu0 %v214
    %695 = vmatprep.subr.mxu0 0.0
    %696 = vmatpush1.msra.mxu0 %v215
    %697 = vmatprep.subr.mxu0 0.0
    %698 = vmatpush1.msra.mxu0 %v216
    %699 = vmatprep.subr.mxu0 0.0
    %700 = vmatpush1.msra.mxu0 %v217
    %701 = vmatprep.subr.mxu0 0.0
    %702 = vmatpush1.msra.mxu0 %v218
    %703 = vmatprep.subr.mxu0 0.0
    %704 = vmatpush1.msra.mxu0 %v219
    %705 = vmatprep.subr.mxu0 0.0
    %706 = vmatpush1.msra.mxu0 %v220
    %707 = vmatprep.subr.mxu0 0.0
    %708 = vmatpush1.msra.mxu0 %v221
    %709 = vmatprep.subr.mxu0 0.0
    %710 = vmatpush1.msra.mxu0 %v222
    %711 = vmatprep.subr.mxu0 0.0
    %712 = vmatpush1.msra.mxu0 %v223
    %713 = vmatprep.subr.mxu0 0.0
    %714 = vmatpush1.msra.mxu0 %v224
    %715 = vmatprep.subr.mxu0 0.0
    %716 = vmatpush1.msra.mxu0 %v225
    %717 = vmatprep.subr.mxu0 0.0
    %718 = vmatpush1.msra.mxu0 %v226
    %719 = vmatprep.subr.mxu0 0.0
    %720 = vmatpush1.msra.mxu0 %v227
    %721 = vmatprep.subr.mxu0 0.0
    %722 = vmatpush1.msra.mxu0 %v228
    %723 = vmatprep.subr.mxu0 0.0
    %724 = vmatpush1.msra.mxu0 %v229
    %725 = vmatprep.subr.mxu0 0.0
    %726 = vmatpush1.msra.mxu0 %v230
    %727 = vmatprep.subr.mxu0 0.0
    %728 = vmatpush1.msra.mxu0 %v231
    %729 = vmatprep.subr.mxu0 0.0
    %730 = vmatpush1.msra.mxu0 %v232
    %731 = vmatprep.subr.mxu0 0.0
    %732 = vmatpush1.msra.mxu0 %v233
    %733 = vmatprep.subr.mxu0 0.0
    %734 = vmatpush1.msra.mxu0 %v234
    %735 = vmatprep.subr.mxu0 0.0
    %736 = vmatpush1.msra.mxu0 %v235
    %737 = vmatprep.subr.mxu0 0.0
    %738 = vmatpush1.msra.mxu0 %v236
    %739 = vmatprep.subr.mxu0 0.0
    %740 = vmatpush1.msra.mxu0 %v237
    %741 = vmatprep.mubr.f32.mxu0 %v95
    %742 = vmatmul.mubr.f32.gmra.mrb[0].mxu0 %v94
    %v743 = vpop.f32.mrb[0].mxu0
    %v744 = vadd.f32 %v674, %v743
    %v745 = vpop.f32.mrb[0].mxu0
    %746 = vdwg.mxu0
    %747 = vmatprep.subr.mxu0 0.0
    %748 = vmatpush1.msra.mxu0 %v238
    %749 = vmatprep.subr.mxu0 0.0
    %750 = vmatpush1.msra.mxu0 %v239
    %751 = vmatprep.subr.mxu0 0.0
    %752 = vmatpush1.msra.mxu0 %v240
    %753 = vmatprep.subr.mxu0 0.0
    %754 = vmatpush1.msra.mxu0 %v241
    %755 = vmatprep.subr.mxu0 0.0
    %756 = vmatpush1.msra.mxu0 %v242
    %757 = vmatprep.subr.mxu0 0.0
    %758 = vmatpush1.msra.mxu0 %v243
    %759 = vmatprep.subr.mxu0 0.0
    %760 = vmatpush1.msra.mxu0 %v244
    %761 = vmatprep.subr.mxu0 0.0
    %762 = vmatpush1.msra.mxu0 %v245
    %763 = vmatprep.subr.mxu0 0.0
    %764 = vmatpush1.msra.mxu0 %v246
    %765 = vmatprep.subr.mxu0 0.0
    %766 = vmatpush1.msra.mxu0 %v247
    %767 = vmatprep.subr.mxu0 0.0
    %768 = vmatpush1.msra.mxu0 %v248
    %769 = vmatprep.subr.mxu0 0.0
    %770 = vmatpush1.msra.mxu0 %v249
    %771 = vmatprep.subr.mxu0 0.0
    %772 = vmatpush1.msra.mxu0 %v250
    %773 = vmatprep.subr.mxu0 0.0
    %774 = vmatpush1.msra.mxu0 %v251
    %775 = vmatprep.subr.mxu0 0.0
    %776 = vmatpush1.msra.mxu0 %v252
    %777 = vmatprep.subr.mxu0 0.0
    %778 = vmatpush1.msra.mxu0 %v253
    %779 = vmatprep.subr.mxu0 0.0
    %780 = vmatpush1.msra.mxu0 %v254
    %781 = vmatprep.subr.mxu0 0.0
    %782 = vmatpush1.msra.mxu0 %v255
    %783 = vmatprep.subr.mxu0 0.0
    %784 = vmatpush1.msra.mxu0 %v256
    %785 = vmatprep.subr.mxu0 0.0
    %786 = vmatpush1.msra.mxu0 %v257
    %787 = vmatprep.subr.mxu0 0.0
    %788 = vmatpush1.msra.mxu0 %v258
    %789 = vmatprep.subr.mxu0 0.0
    %790 = vmatpush1.msra.mxu0 %v259
    %791 = vmatprep.subr.mxu0 0.0
    %792 = vmatpush1.msra.mxu0 %v260
    %793 = vmatprep.subr.mxu0 0.0
    %794 = vmatpush1.msra.mxu0 %v261
    %795 = vmatprep.subr.mxu0 0.0
    %796 = vmatpush1.msra.mxu0 %v262
    %797 = vmatprep.subr.mxu0 0.0
    %798 = vmatpush1.msra.mxu0 %v263
    %799 = vmatprep.subr.mxu0 0.0
    %800 = vmatpush1.msra.mxu0 %v264
    %801 = vmatprep.subr.mxu0 0.0
    %802 = vmatpush1.msra.mxu0 %v265
    %803 = vmatprep.subr.mxu0 0.0
    %804 = vmatpush1.msra.mxu0 %v266
    %805 = vmatprep.subr.mxu0 0.0
    %806 = vmatpush1.msra.mxu0 %v267
    %807 = vmatprep.subr.mxu0 0.0
    %808 = vmatpush1.msra.mxu0 %v268
    %809 = vmatprep.subr.mxu0 0.0
    %810 = vmatpush1.msra.mxu0 %v269
    %811 = vmatprep.mubr.f32.mxu0 %v97
    %812 = vmatmul.mubr.f32.gmra.mrb[0].mxu0 %v96
    %v813 = vpop.f32.mrb[0].mxu0
    %v814 = vadd.f32 %v744, %v813
    %v815 = vpop.f32.mrb[0].mxu0
    %816 = vdwg.mxu0
    %817 = vmatprep.subr.mxu0 0.0
    %818 = vmatpush1.msra.mxu0 %v270
    %819 = vmatprep.subr.mxu0 0.0
    %820 = vmatpush1.msra.mxu0 %v271
    %821 = vmatprep.subr.mxu0 0.0
    %822 = vmatpush1.msra.mxu0 %v272
    %823 = vmatprep.subr.mxu0 0.0
    %824 = vmatpush1.msra.mxu0 %v273
    %825 = vmatprep.subr.mxu0 0.0
    %826 = vmatpush1.msra.mxu0 %v274
    %827 = vmatprep.subr.mxu0 0.0
    %828 = vmatpush1.msra.mxu0 %v275
    %829 = vmatprep.subr.mxu0 0.0
    %830 = vmatpush1.msra.mxu0 %v276
    %831 = vmatprep.subr.mxu0 0.0
    %832 = vmatpush1.msra.mxu0 %v277
    %833 = vmatprep.subr.mxu0 0.0
    %834 = vmatpush1.msra.mxu0 %v278
    %835 = vmatprep.subr.mxu0 0.0
    %836 = vmatpush1.msra.mxu0 %v279
    %837 = vmatprep.subr.mxu0 0.0
    %838 = vmatpush1.msra.mxu0 %v280
    %839 = vmatprep.subr.mxu0 0.0
    %840 = vmatpush1.msra.mxu0 %v281
    %841 = vmatprep.subr.mxu0 0.0
    %842 = vmatpush1.msra.mxu0 %v282
    %843 = vmatprep.subr.mxu0 0.0
    %844 = vmatpush1.msra.mxu0 %v283
    %845 = vmatprep.subr.mxu0 0.0
    %846 = vmatpush1.msra.mxu0 %v284
    %847 = vmatprep.subr.mxu0 0.0
    %848 = vmatpush1.msra.mxu0 %v285
    %849 = vmatprep.subr.mxu0 0.0
    %850 = vmatpush1.msra.mxu0 %v286
    %851 = vmatprep.subr.mxu0 0.0
    %852 = vmatpush1.msra.mxu0 %v287
    %853 = vmatprep.subr.mxu0 0.0
    %854 = vmatpush1.msra.mxu0 %v288
    %855 = vmatprep.subr.mxu0 0.0
    %856 = vmatpush1.msra.mxu0 %v289
    %857 = vmatprep.subr.mxu0 0.0
    %858 = vmatpush1.msra.mxu0 %v290
    %859 = vmatprep.subr.mxu0 0.0
    %860 = vmatpush1.msra.mxu0 %v291
    %861 = vmatprep.subr.mxu0 0.0
    %862 = vmatpush1.msra.mxu0 %v292
    %863 = vmatprep.subr.mxu0 0.0
    %864 = vmatpush1.msra.mxu0 %v293
    %865 = vmatprep.subr.mxu0 0.0
    %866 = vmatpush1.msra.mxu0 %v294
    %867 = vmatprep.subr.mxu0 0.0
    %868 = vmatpush1.msra.mxu0 %v295
    %869 = vmatprep.subr.mxu0 0.0
    %870 = vmatpush1.msra.mxu0 %v296
    %871 = vmatprep.subr.mxu0 0.0
    %872 = vmatpush1.msra.mxu0 %v297
    %873 = vmatprep.subr.mxu0 0.0
    %874 = vmatpush1.msra.mxu0 %v298
    %875 = vmatprep.subr.mxu0 0.0
    %876 = vmatpush1.msra.mxu0 %v299
    %877 = vmatprep.subr.mxu0 0.0
    %878 = vmatpush1.msra.mxu0 %v300
    %879 = vmatprep.subr.mxu0 0.0
    %880 = vmatpush1.msra.mxu0 %v301
    %881 = vmatprep.mubr.f32.mxu0 %v99
    %882 = vmatmul.mubr.f32.gmra.mrb[0].mxu0 %v98
    %v883 = vpop.f32.mrb[0].mxu0
    %v884 = vadd.f32 %v814, %v883
    %v885 = vpop.f32.mrb[0].mxu0
    %886 = vdwg.mxu0
    %887 = vmatprep.subr.mxu0 0.0
    %888 = vmatpush1.msra.mxu0 %v302
    %889 = vmatprep.subr.mxu0 0.0
    %890 = vmatpush1.msra.mxu0 %v303
    %891 = vmatprep.subr.mxu0 0.0
    %892 = vmatpush1.msra.mxu0 %v304
    %893 = vmatprep.subr.mxu0 0.0
    %894 = vmatpush1.msra.mxu0 %v305
    %895 = vmatprep.subr.mxu0 0.0
    %896 = vmatpush1.msra.mxu0 %v306
    %897 = vmatprep.subr.mxu0 0.0
    %898 = vmatpush1.msra.mxu0 %v307
    %899 = vmatprep.subr.mxu0 0.0
    %900 = vmatpush1.msra.mxu0 %v308
    %901 = vmatprep.subr.mxu0 0.0
    %902 = vmatpush1.msra.mxu0 %v309
    %903 = vmatprep.subr.mxu0 0.0
    %904 = vmatpush1.msra.mxu0 %v310
    %905 = vmatprep.subr.mxu0 0.0
    %906 = vmatpush1.msra.mxu0 %v311
    %907 = vmatprep.subr.mxu0 0.0
    %908 = vmatpush1.msra.mxu0 %v312
    %909 = vmatprep.subr.mxu0 0.0
    %910 = vmatpush1.msra.mxu0 %v313
    %911 = vmatprep.subr.mxu0 0.0
    %912 = vmatpush1.msra.mxu0 %v314
    %913 = vmatprep.subr.mxu0 0.0
    %914 = vmatpush1.msra.mxu0 %v315
    %915 = vmatprep.subr.mxu0 0.0
    %916 = vmatpush1.msra.mxu0 %v316
    %917 = vmatprep.subr.mxu0 0.0
    %918 = vmatpush1.msra.mxu0 %v317
    %919 = vmatprep.subr.mxu0 0.0
    %920 = vmatpush1.msra.mxu0 %v318
    %921 = vmatprep.subr.mxu0 0.0
    %922 = vmatpush1.msra.mxu0 %v319
    %923 = vmatprep.subr.mxu0 0.0
    %924 = vmatpush1.msra.mxu0 %v320
    %925 = vmatprep.subr.mxu0 0.0
    %926 = vmatpush1.msra.mxu0 %v321
    %927 = vmatprep.subr.mxu0 0.0
    %928 = vmatpush1.msra.mxu0 %v322
    %929 = vmatprep.subr.mxu0 0.0
    %930 = vmatpush1.msra.mxu0 %v323
    %931 = vmatprep.subr.mxu0 0.0
    %932 = vmatpush1.msra.mxu0 %v324
    %933 = vmatprep.subr.mxu0 0.0
    %934 = vmatpush1.msra.mxu0 %v325
    %935 = vmatprep.subr.mxu0 0.0
    %936 = vmatpush1.msra.mxu0 %v326
    %937 = vmatprep.subr.mxu0 0.0
    %938 = vmatpush1.msra.mxu0 %v327
    %939 = vmatprep.subr.mxu0 0.0
    %940 = vmatpush1.msra.mxu0 %v328
    %941 = vmatprep.subr.mxu0 0.0
    %942 = vmatpush1.msra.mxu0 %v329
    %943 = vmatprep.subr.mxu0 0.0
    %944 = vmatpush1.msra.mxu0 %v330
    %945 = vmatprep.subr.mxu0 0.0
    %946 = vmatpush1.msra.mxu0 %v331
    %947 = vmatprep.subr.mxu0 0.0
    %948 = vmatpush1.msra.mxu0 %v332
    %949 = vmatprep.subr.mxu0 0.0
    %950 = vmatpush1.msra.mxu0 %v333
    %951 = vmatprep.mubr.f32.mxu0 %v101
    %952 = vmatmul.mubr.f32.gmra.mrb[0].mxu0 %v100
    %v953 = vpop.f32.mrb[0].mxu0
    %v954 = vadd.f32 %v884, %v953
    %v955 = vpop.f32.mrb[0].mxu0
    %956 = vdwg.mxu0
    %957 = vmatprep.subr.mxu0 0.0
    %958 = vmatpush1.msra.mxu0 %v334
    %959 = vmatprep.subr.mxu0 0.0
    %960 = vmatpush1.msra.mxu0 %v335
    %961 = vmatprep.subr.mxu0 0.0
    %962 = vmatpush1.msra.mxu0 %v336
    %963 = vmatprep.subr.mxu0 0.0
    %964 = vmatpush1.msra.mxu0 %v337
    %965 = vmatprep.subr.mxu0 0.0
    %966 = vmatpush1.msra.mxu0 %v338
    %967 = vmatprep.subr.mxu0 0.0
    %968 = vmatpush1.msra.mxu0 %v339
    %969 = vmatprep.subr.mxu0 0.0
    %970 = vmatpush1.msra.mxu0 %v340
    %971 = vmatprep.subr.mxu0 0.0
    %972 = vmatpush1.msra.mxu0 %v341
    %973 = vmatprep.subr.mxu0 0.0
    %974 = vmatpush1.msra.mxu0 %v342
    %975 = vmatprep.subr.mxu0 0.0
    %976 = vmatpush1.msra.mxu0 %v343
    %977 = vmatprep.subr.mxu0 0.0
    %978 = vmatpush1.msra.mxu0 %v344
    %979 = vmatprep.subr.mxu0 0.0
    %980 = vmatpush1.msra.mxu0 %v345
    %981 = vmatprep.subr.mxu0 0.0
    %982 = vmatpush1.msra.mxu0 %v346
    %983 = vmatprep.subr.mxu0 0.0
    %984 = vmatpush1.msra.mxu0 %v347
    %985 = vmatprep.subr.mxu0 0.0
    %986 = vmatpush1.msra.mxu0 %v348
    %987 = vmatprep.subr.mxu0 0.0
    %988 = vmatpush1.msra.mxu0 %v349
    %989 = vmatprep.subr.mxu0 0.0
    %990 = vmatpush1.msra.mxu0 %v350
    %991 = vmatprep.subr.mxu0 0.0
    %992 = vmatpush1.msra.mxu0 %v351
    %993 = vmatprep.subr.mxu0 0.0
    %994 = vmatpush1.msra.mxu0 %v352
    %995 = vmatprep.subr.mxu0 0.0
    %996 = vmatpush1.msra.mxu0 %v353
    %997 = vmatprep.subr.mxu0 0.0
    %998 = vmatpush1.msra.mxu0 %v354
    %999 = vmatprep.subr.mxu0 0.0
    %1000 = vmatpush1.msra.mxu0 %v355
    %1001 = vmatprep.subr.mxu0 0.0
    %1002 = vmatpush1.msra.mxu0 %v356
    %1003 = vmatprep.subr.mxu0 0.0
    %1004 = vmatpush1.msra.mxu0 %v357
    %1005 = vmatprep.subr.mxu0 0.0
    %1006 = vmatpush1.msra.mxu0 %v358
    %1007 = vmatprep.subr.mxu0 0.0
    %1008 = vmatpush1.msra.mxu0 %v359
    %1009 = vmatprep.subr.mxu0 0.0
    %1010 = vmatpush1.msra.mxu0 %v360
    %1011 = vmatprep.subr.mxu0 0.0
    %1012 = vmatpush1.msra.mxu0 %v361
    %1013 = vmatprep.subr.mxu0 0.0
    %1014 = vmatpush1.msra.mxu0 %v362
    %1015 = vmatprep.subr.mxu0 0.0
    %1016 = vmatpush1.msra.mxu0 %v363
    %1017 = vmatprep.subr.mxu0 0.0
    %1018 = vmatpush1.msra.mxu0 %v364
    %1019 = vmatprep.subr.mxu0 0.0
    %1020 = vmatpush1.msra.mxu0 %v365
    %1021 = vmatprep.mubr.f32.mxu0 %v103
    %1022 = vmatmul.mubr.f32.gmra.mrb[0].mxu0 %v102
    %v1023 = vpop.f32.mrb[0].mxu0
    %v1024 = vadd.f32 %v954, %v1023
    %v1025 = vpop.f32.mrb[0].mxu0
    %1026 = vdwg.mxu0
    %1027 = vmatprep.subr.mxu0 0.0
    %1028 = vmatpush1.msra.mxu0 %v366
    %1029 = vmatprep.subr.mxu0 0.0
    %1030 = vmatpush1.msra.mxu0 %v367
    %1031 = vmatprep.subr.mxu0 0.0
    %1032 = vmatpush1.msra.mxu0 %v368
    %1033 = vmatprep.subr.mxu0 0.0
    %1034 = vmatpush1.msra.mxu0 %v369
    %1035 = vmatprep.subr.mxu0 0.0
    %1036 = vmatpush1.msra.mxu0 %v370
    %1037 = vmatprep.subr.mxu0 0.0
    %1038 = vmatpush1.msra.mxu0 %v371
    %1039 = vmatprep.subr.mxu0 0.0
    %1040 = vmatpush1.msra.mxu0 %v372
    %1041 = vmatprep.subr.mxu0 0.0
    %1042 = vmatpush1.msra.mxu0 %v373
    %1043 = vmatprep.subr.mxu0 0.0
    %1044 = vmatpush1.msra.mxu0 %v374
    %1045 = vmatprep.subr.mxu0 0.0
    %1046 = vmatpush1.msra.mxu0 %v375
    %1047 = vmatprep.subr.mxu0 0.0
    %1048 = vmatpush1.msra.mxu0 %v376
    %1049 = vmatprep.subr.mxu0 0.0
    %1050 = vmatpush1.msra.mxu0 %v377
    %1051 = vmatprep.subr.mxu0 0.0
    %1052 = vmatpush1.msra.mxu0 %v378
    %1053 = vmatprep.subr.mxu0 0.0
    %1054 = vmatpush1.msra.mxu0 %v379
    %1055 = vmatprep.subr.mxu0 0.0
    %1056 = vmatpush1.msra.mxu0 %v380
    %1057 = vmatprep.subr.mxu0 0.0
    %1058 = vmatpush1.msra.mxu0 %v381
    %1059 = vmatprep.subr.mxu0 0.0
    %1060 = vmatpush1.msra.mxu0 %v382
    %1061 = vmatprep.subr.mxu0 0.0
    %1062 = vmatpush1.msra.mxu0 %v383
    %1063 = vmatprep.subr.mxu0 0.0
    %1064 = vmatpush1.msra.mxu0 %v384
    %1065 = vmatprep.subr.mxu0 0.0
    %1066 = vmatpush1.msra.mxu0 %v385
    %1067 = vmatprep.subr.mxu0 0.0
    %1068 = vmatpush1.msra.mxu0 %v386
    %1069 = vmatprep.subr.mxu0 0.0
    %1070 = vmatpush1.msra.mxu0 %v387
    %1071 = vmatprep.subr.mxu0 0.0
    %1072 = vmatpush1.msra.mxu0 %v388
    %1073 = vmatprep.subr.mxu0 0.0
    %1074 = vmatpush1.msra.mxu0 %v389
    %1075 = vmatprep.subr.mxu0 0.0
    %1076 = vmatpush1.msra.mxu0 %v390
    %1077 = vmatprep.subr.mxu0 0.0
    %1078 = vmatpush1.msra.mxu0 %v391
    %1079 = vmatprep.subr.mxu0 0.0
    %1080 = vmatpush1.msra.mxu0 %v392
    %1081 = vmatprep.subr.mxu0 0.0
    %1082 = vmatpush1.msra.mxu0 %v393
    %1083 = vmatprep.subr.mxu0 0.0
    %1084 = vmatpush1.msra.mxu0 %v394
    %1085 = vmatprep.subr.mxu0 0.0
    %1086 = vmatpush1.msra.mxu0 %v395
    %1087 = vmatprep.subr.mxu0 0.0
    %1088 = vmatpush1.msra.mxu0 %v396
    %1089 = vmatprep.subr.mxu0 0.0
    %1090 = vmatpush1.msra.mxu0 %v397
    %1091 = vmatprep.mubr.f32.mxu0 %v105
    %1092 = vmatmul.mubr.f32.gmra.mrb[0].mxu0 %v104
    %v1093 = vpop.f32.mrb[0].mxu0
    %v1094 = vadd.f32 %v1024, %v1093
    %v1095 = vpop.f32.mrb[0].mxu0
    %1096 = vdwg.mxu0
    %1097 = vmatprep.subr.mxu0 0.0
    %1098 = vmatpush1.msra.mxu0 %v398
    %1099 = vmatprep.subr.mxu0 0.0
    %1100 = vmatpush1.msra.mxu0 %v399
    %1101 = vmatprep.subr.mxu0 0.0
    %1102 = vmatpush1.msra.mxu0 %v400
    %1103 = vmatprep.subr.mxu0 0.0
    %1104 = vmatpush1.msra.mxu0 %v401
    %1105 = vmatprep.subr.mxu0 0.0
    %1106 = vmatpush1.msra.mxu0 %v402
    %1107 = vmatprep.subr.mxu0 0.0
    %1108 = vmatpush1.msra.mxu0 %v403
    %1109 = vmatprep.subr.mxu0 0.0
    %1110 = vmatpush1.msra.mxu0 %v404
    %1111 = vmatprep.subr.mxu0 0.0
    %1112 = vmatpush1.msra.mxu0 %v405
    %1113 = vmatprep.subr.mxu0 0.0
    %1114 = vmatpush1.msra.mxu0 %v406
    %1115 = vmatprep.subr.mxu0 0.0
    %1116 = vmatpush1.msra.mxu0 %v407
    %1117 = vmatprep.subr.mxu0 0.0
    %1118 = vmatpush1.msra.mxu0 %v408
    %1119 = vmatprep.subr.mxu0 0.0
    %1120 = vmatpush1.msra.mxu0 %v409
    %1121 = vmatprep.subr.mxu0 0.0
    %1122 = vmatpush1.msra.mxu0 %v410
    %1123 = vmatprep.subr.mxu0 0.0
    %1124 = vmatpush1.msra.mxu0 %v411
    %1125 = vmatprep.subr.mxu0 0.0
    %1126 = vmatpush1.msra.mxu0 %v412
    %1127 = vmatprep.subr.mxu0 0.0
    %1128 = vmatpush1.msra.mxu0 %v413
    %1129 = vmatprep.subr.mxu0 0.0
    %1130 = vmatpush1.msra.mxu0 %v414
    %1131 = vmatprep.subr.mxu0 0.0
    %1132 = vmatpush1.msra.mxu0 %v415
    %1133 = vmatprep.subr.mxu0 0.0
    %1134 = vmatpush1.msra.mxu0 %v416
    %1135 = vmatprep.subr.mxu0 0.0
    %1136 = vmatpush1.msra.mxu0 %v417
    %1137 = vmatprep.subr.mxu0 0.0
    %1138 = vmatpush1.msra.mxu0 %v418
    %1139 = vmatprep.subr.mxu0 0.0
    %1140 = vmatpush1.msra.mxu0 %v419
    %1141 = vmatprep.subr.mxu0 0.0
    %1142 = vmatpush1.msra.mxu0 %v420
    %1143 = vmatprep.subr.mxu0 0.0
    %1144 = vmatpush1.msra.mxu0 %v421
    %1145 = vmatprep.subr.mxu0 0.0
    %1146 = vmatpush1.msra.mxu0 %v422
    %1147 = vmatprep.subr.mxu0 0.0
    %1148 = vmatpush1.msra.mxu0 %v423
    %1149 = vmatprep.subr.mxu0 0.0
    %1150 = vmatpush1.msra.mxu0 %v424
    %1151 = vmatprep.subr.mxu0 0.0
    %1152 = vmatpush1.msra.mxu0 %v425
    %1153 = vmatprep.subr.mxu0 0.0
    %1154 = vmatpush1.msra.mxu0 %v426
    %1155 = vmatprep.subr.mxu0 0.0
    %1156 = vmatpush1.msra.mxu0 %v427
    %1157 = vmatprep.subr.mxu0 0.0
    %1158 = vmatpush1.msra.mxu0 %v428
    %1159 = vmatprep.subr.mxu0 0.0
    %1160 = vmatpush1.msra.mxu0 %v429
    %1161 = vmatprep.mubr.f32.mxu0 %v107
    %1162 = vmatmul.mubr.f32.gmra.mrb[0].mxu0 %v106
    %v1163 = vpop.f32.mrb[0].mxu0
    %v1164 = vadd.f32 %v1094, %v1163
    %v1165 = vpop.f32.mrb[0].mxu0
    %1166 = vdwg.mxu0
    %1167 = vmatprep.subr.mxu0 0.0
    %1168 = vmatpush1.msra.mxu0 %v430
    %1169 = vmatprep.subr.mxu0 0.0
    %1170 = vmatpush1.msra.mxu0 %v431
    %1171 = vmatprep.subr.mxu0 0.0
    %1172 = vmatpush1.msra.mxu0 %v432
    %1173 = vmatprep.subr.mxu0 0.0
    %1174 = vmatpush1.msra.mxu0 %v433
    %1175 = vmatprep.subr.mxu0 0.0
    %1176 = vmatpush1.msra.mxu0 %v434
    %1177 = vmatprep.subr.mxu0 0.0
    %1178 = vmatpush1.msra.mxu0 %v435
    %1179 = vmatprep.subr.mxu0 0.0
    %1180 = vmatpush1.msra.mxu0 %v436
    %1181 = vmatprep.subr.mxu0 0.0
    %1182 = vmatpush1.msra.mxu0 %v437
    %1183 = vmatprep.subr.mxu0 0.0
    %1184 = vmatpush1.msra.mxu0 %v438
    %1185 = vmatprep.subr.mxu0 0.0
    %1186 = vmatpush1.msra.mxu0 %v439
    %1187 = vmatprep.subr.mxu0 0.0
    %1188 = vmatpush1.msra.mxu0 %v440
    %1189 = vmatprep.subr.mxu0 0.0
    %1190 = vmatpush1.msra.mxu0 %v441
    %1191 = vmatprep.subr.mxu0 0.0
    %1192 = vmatpush1.msra.mxu0 %v442
    %1193 = vmatprep.subr.mxu0 0.0
    %1194 = vmatpush1.msra.mxu0 %v443
    %1195 = vmatprep.subr.mxu0 0.0
    %1196 = vmatpush1.msra.mxu0 %v444
    %1197 = vmatprep.subr.mxu0 0.0
    %1198 = vmatpush1.msra.mxu0 %v445
    %1199 = vmatprep.subr.mxu0 0.0
    %1200 = vmatpush1.msra.mxu0 %v446
    %1201 = vmatprep.subr.mxu0 0.0
    %1202 = vmatpush1.msra.mxu0 %v447
    %1203 = vmatprep.subr.mxu0 0.0
    %1204 = vmatpush1.msra.mxu0 %v448
    %1205 = vmatprep.subr.mxu0 0.0
    %1206 = vmatpush1.msra.mxu0 %v449
    %1207 = vmatprep.subr.mxu0 0.0
    %1208 = vmatpush1.msra.mxu0 %v450
    %1209 = vmatprep.subr.mxu0 0.0
    %1210 = vmatpush1.msra.mxu0 %v465
    %1211 = vmatprep.subr.mxu0 0.0
    %1212 = vmatpush1.msra.mxu0 0.0
    %1213 = vmatprep.subr.mxu0 0.0
    %1214 = vmatpush1.msra.mxu0 0.0
    %1215 = vmatprep.subr.mxu0 0.0
    %1216 = vmatpush1.msra.mxu0 0.0
    %1217 = vmatprep.subr.mxu0 0.0
    %1218 = vmatpush1.msra.mxu0 0.0
    %1219 = vmatprep.subr.mxu0 0.0
    %1220 = vmatpush1.msra.mxu0 0.0
    %1221 = vmatprep.subr.mxu0 0.0
    %1222 = vmatpush1.msra.mxu0 0.0
    %1223 = vmatprep.subr.mxu0 0.0
    %1224 = vmatpush1.msra.mxu0 0.0
    %1225 = vmatprep.subr.mxu0 0.0
    %1226 = vmatpush1.msra.mxu0 0.0
    %1227 = vmatprep.subr.mxu0 0.0
    %1228 = vmatpush1.msra.mxu0 0.0
    %1229 = vmatprep.subr.mxu0 0.0
    %1230 = vmatpush1.msra.mxu0 0.0
    %1231 = vmatprep.mubr.f32.mxu0 %v461
    %1232 = vmatmul.mubr.f32.gmra.mrb[0].mxu0 %v108
    %v1233 = vpop.f32.mrb[0].mxu0
    %v1234 = vadd.f32 %v1164, %v1233
    %v1235 = vpop.f32.mrb[0].mxu0
    %1236 = vdwg.mxu0
    %v1237 = vmax.f32 %v1234, 0.0
    %v1238 = vld [vmem:[%s3] sm:$0xff]
    %v1239 = vld [vmem:[%s3 + $0x8] sm:$0xff]
    %v1240 = vld [vmem:[%s3 + $0x10] sm:$0xff]
    %v1241 = vld [vmem:[%s3 + $0x18] sm:$0xff]
    %v1242 = vld [vmem:[%s3 + $0x20] sm:$0xff]
    %v1243 = vld [vmem:[%s3 + $0x28] sm:$0xff]
    %v1244 = vld [vmem:[%s3 + $0x30] sm:$0xff]
    %v1245 = vld [vmem:[%s3 + $0x38] sm:$0xff]
    %v1246 = vld [vmem:[%s3 + $0x40] sm:$0xff]
    %v1247 = vld [vmem:[%s3 + $0x48] sm:$0xff]
    %v1248 = vld [vmem:[%s3 + $0x50] sm:$0xff]
    %v1249 = vld [vmem:[%s3 + $0x58] sm:$0xff]
    %v1250 = vld [vmem:[%s3 + $0x60] sm:$0xff]
    %v1251 = vld [vmem:[%s3 + $0x68] sm:$0xff]
    %v1252 = vld [vmem:[%s3 + $0x70] sm:$0xff]
    %v1253 = vld [vmem:[%s3 + $0x78] sm:$0xff]
    %v1254 = vld [vmem:[#allocation8] sm:$0x1]
    %v1256 = vlaneseq
    %v1257 = vshrl.u32 %v1256, 7
    %v1258 = vsub.s32 0, %v1257
    %v1259 = vrot.slane %v1254, %v1258
    %1261 = vmatprep.subr.mxu0 0.0
    %1262 = vmatpush1.msra.mxu0 %v1238
    %1263 = vmatprep.subr.mxu0 0.0
    %1264 = vmatpush1.msra.mxu0 %v1239
    %1265 = vmatprep.subr.mxu0 0.0
    %1266 = vmatpush1.msra.mxu0 %v1240
    %1267 = vmatprep.subr.mxu0 0.0
    %1268 = vmatpush1.msra.mxu0 %v1241
    %1269 = vmatprep.subr.mxu0 0.0
    %1270 = vmatpush1.msra.mxu0 %v1242
    %1271 = vmatprep.subr.mxu0 0.0
    %1272 = vmatpush1.msra.mxu0 %v1243
    %1273 = vmatprep.subr.mxu0 0.0
    %1274 = vmatpush1.msra.mxu0 %v1244
    %1275 = vmatprep.subr.mxu0 0.0
    %1276 = vmatpush1.msra.mxu0 %v1245
    %1277 = vmatprep.subr.mxu0 0.0
    %1278 = vmatpush1.msra.mxu0 %v1246
    %1279 = vmatprep.subr.mxu0 0.0
    %1280 = vmatpush1.msra.mxu0 %v1247
    %1281 = vmatprep.subr.mxu0 0.0
    %1282 = vmatpush1.msra.mxu0 %v1248
    %1283 = vmatprep.subr.mxu0 0.0
    %1284 = vmatpush1.msra.mxu0 %v1249
    %1285 = vmatprep.subr.mxu0 0.0
    %1286 = vmatpush1.msra.mxu0 %v1250
    %1287 = vmatprep.subr.mxu0 0.0
    %1288 = vmatpush1.msra.mxu0 %v1251
    %1289 = vmatprep.subr.mxu0 0.0
    %1290 = vmatpush1.msra.mxu0 %v1252
    %1291 = vmatprep.subr.mxu0 0.0
    %1292 = vmatpush1.msra.mxu0 %v1253
    %1293 = vmatprep.subr.mxu0 0.0
    %1294 = vmatpush1.msra.mxu0 0.0
    %1295 = vmatprep.subr.mxu0 0.0
    %1296 = vmatpush1.msra.mxu0 0.0
    %1297 = vmatprep.subr.mxu0 0.0
    %1298 = vmatpush1.msra.mxu0 0.0
    %1299 = vmatprep.subr.mxu0 0.0
    %1300 = vmatpush1.msra.mxu0 0.0
    %1301 = vmatprep.subr.mxu0 0.0
    %1302 = vmatpush1.msra.mxu0 0.0
    %1303 = vmatprep.subr.mxu0 0.0
    %1304 = vmatpush1.msra.mxu0 0.0
    %1305 = vmatprep.subr.mxu0 0.0
    %1306 = vmatpush1.msra.mxu0 0.0
    %1307 = vmatprep.subr.mxu0 0.0
    %1308 = vmatpush1.msra.mxu0 0.0
    %1309 = vmatprep.subr.mxu0 0.0
    %1310 = vmatpush1.msra.mxu0 0.0
    %1311 = vmatprep.subr.mxu0 0.0
    %1312 = vmatpush1.msra.mxu0 0.0
    %1313 = vmatprep.subr.mxu0 0.0
    %1314 = vmatpush1.msra.mxu0 0.0
    %1315 = vmatprep.subr.mxu0 0.0
    %1316 = vmatpush1.msra.mxu0 0.0
    %1317 = vmatprep.subr.mxu0 0.0
    %1318 = vmatpush1.msra.mxu0 0.0
    %1319 = vmatprep.subr.mxu0 0.0
    %1320 = vmatpush1.msra.mxu0 0.0
    %1321 = vmatprep.subr.mxu0 0.0
    %1322 = vmatpush1.msra.mxu0 0.0
    %1323 = vmatprep.subr.mxu0 0.0
    %1324 = vmatpush1.msra.mxu0 0.0
    %1325 = vmatprep.mubr.f32.mxu0 0.0
    %1326 = vmatmul.mubr.f32.gmra.mrb[0].mxu0 %v1237
    %v1327 = vpop.f32.mrb[0].mxu0
    %v1328 = vadd.f32 %v1259, %v1327
    %v1329 = vpop.f32.mrb[0].mxu0
    %1330 = vdwg.mxu0
    %v1331 = vmax.f32 %v1328, 0.0
    %v1332 = vld [vmem:[#allocation10] sm:$0x1]
    %v1334 = vlaneseq
    %v1335 = vshrl.u32 %v1334, 7
    %v1336 = vsub.s32 0, %v1335
    %v1337 = vrot.slane %v1332, %v1336
    %v1339 = vmul.f32 %v1331, %v1337
    %vm1340 = vcmask 523264
    %v1341 = vsel %vm1340, %v1339, 0.0
    %1342 = vadd.xlane.f32.xlu0 %v1341
    %v1343 = vpop.xlane.xlu0 %1342
    %v1344 = vld [vmem:[#allocation2] sm:$0x1]
    %v1346 = vlaneseq
    %v1347 = vshrl.u32 %v1346, 7
    %v1348 = vsub.s32 0, %v1347
    %v1349 = vrot.slane %v1344, %v1348
    %v1351 = vadd.f32 %v1343, %v1349
    %vm1352 = vcmask 7168
    %1353 = vst.msk [vmem:[%s7] sm:$0xff] %vm1352, %v1351
    // Predicated region
    $region50: #{tpu_custom_call.1} parent=1 // pred_check
      _
    $region51: #{tpu_custom_call.1} parent=1 // pred_check_branch
      %1355 = sbr.rel (0) target = $region53
    $region52: #{tpu_custom_call.1} parent=1 // pred_region
      _
    $region53: #{tpu_custom_call.1} parent=1 // pred_fallthru
      _
    // Predicated region
    $region54: #{tpu_custom_call.1} parent=1 // pred_check
      _
    $region55: #{tpu_custom_call.1} parent=1 // pred_check_branch
      %1357 = sbr.rel (0) target = $region57
    $region56: #{tpu_custom_call.1} parent=1 // pred_region
      _
    $region57: #{tpu_custom_call.1} parent=1 // pred_fallthru
      _
    %1358 = vsyncpa [#allocation4], 1
    %1359 = vsyncpa [#allocation6], 1
    %1360 = vsyncpa [#allocation9], 1

</llo_original>
